<compile_context>
chip_gen: v6e
topology: v6e:2x2x1
jax: 0.10.0
libtpu: 0.0.40
codegen_flags: <defaults>
</compile_context>

<pallas_src>
import jax
import jax.numpy as jnp
from jax.experimental import pallas as pl
from jax.experimental.pallas import tpu as pltpu

_VMEM_LIMIT = 32 * 1024 * 1024   # safe on v5e/v6e/v7x (v7x physical VMEM = 64 MiB)


# ----------------------------------------------------------------------------
# Kernel 1: conv (3 block-Toeplitz matmuls) + per-image BN partial stats
# ----------------------------------------------------------------------------
def conv_stats_kernel(xpad_ref, w_ref, y_ref, stats_ref):
    # xpad_ref : (1, H+2, W*C)  bf16   (H zero-padded by one halo row top/bottom)
    # w_ref    : (3, W*C, W*C)  bf16   block-Toeplitz weight, one slab per dy
    # y_ref    : (1, H,   W*C)  f32    raw conv output
    # stats_ref: (1, 2,   W*C)  f32    [per-lane sum over H, per-lane sum of squares]
    h = y_ref.shape[1]
    x = xpad_ref[0]                                    # (H+2, W*C) bf16
    acc = jnp.zeros(y_ref.shape[1:], jnp.float32)
    for dy in range(3):                                # unrolled, 3 MXU matmuls
        acc += jnp.dot(x[dy:dy + h, :], w_ref[dy],
                       preferred_element_type=jnp.float32)
    y_ref[0] = acc
    stats_ref[0, 0:1, :] = jnp.sum(acc, axis=0, keepdims=True)
    stats_ref[0, 1:2, :] = jnp.sum(acc * acc, axis=0, keepdims=True)


# ----------------------------------------------------------------------------
# Kernel 2: bn(prev global stats) + relu fused into the next conv + its stats
# ----------------------------------------------------------------------------
def bn_relu_conv_stats_kernel(y1_ref, scale_ref, shift_ref, w_ref,
                              y2_ref, stats_ref, pad_scratch):
    # y1_ref     : (1, H, W*C) f32    raw conv1 output
    # scale/shift: (1, W*C)    f32    lane-expanded BN affine (global stats)
    # w_ref      : (3, W*C, W*C) bf16
    # y2_ref     : (1, H, W*C) f32
    # stats_ref  : (1, 2, W*C) f32
    # pad_scratch: (H+2, W*C)  bf16   halo-padded bn1+relu activation (VMEM)
    h = y1_ref.shape[1]
    a = jnp.maximum(y1_ref[0] * scale_ref[...] + shift_ref[...], 0.0)   # f32 VPU
    pad_scratch[...] = jnp.zeros_like(pad_scratch)                      # halo rows = 0
    pad_scratch[1:h + 1, :] = a.astype(pad_scratch.dtype)               # bf16 for MXU
    acc = jnp.zeros(y2_ref.shape[1:], jnp.float32)
    for dy in range(3):
        acc += jnp.dot(pad_scratch[dy:dy + h, :], w_ref[dy],
                       preferred_element_type=jnp.float32)
    y2_ref[0] = acc
    stats_ref[0, 0:1, :] = jnp.sum(acc, axis=0, keepdims=True)
    stats_ref[0, 1:2, :] = jnp.sum(acc * acc, axis=0, keepdims=True)


# ----------------------------------------------------------------------------
# Kernel 3: bn(global stats) + residual add + relu
# ----------------------------------------------------------------------------
def bn_add_relu_kernel(y_ref, scale_ref, shift_ref, ident_ref, out_ref):
    z = y_ref[0] * scale_ref[...] + shift_ref[...] + ident_ref[0]
    out_ref[0] = jnp.maximum(z, 0.0)


# ----------------------------------------------------------------------------
# pallas_call wrappers
# ----------------------------------------------------------------------------
def _compiler_params():
    return pltpu.CompilerParams(dimension_semantics=("parallel",),
                                vmem_limit_bytes=_VMEM_LIMIT)


def _conv_stage(x_pad, w_t, *, n, h, wc):
    return pl.pallas_call(
        conv_stats_kernel,
        grid=(n,),
        in_specs=[
            pl.BlockSpec((1, h + 2, wc), lambda i: (i, 0, 0)),
            pl.BlockSpec((3, wc, wc), lambda i: (0, 0, 0)),      # resident weight
        ],
        out_specs=[
            pl.BlockSpec((1, h, wc), lambda i: (i, 0, 0)),
            pl.BlockSpec((1, 2, wc), lambda i: (i, 0, 0)),
        ],
        out_shape=(jax.ShapeDtypeStruct((n, h, wc), jnp.float32),
                   jax.ShapeDtypeStruct((n, 2, wc), jnp.float32)),
        compiler_params=_compiler_params(),
    )(x_pad, w_t)


def _bn_relu_conv_stage(y1, scale, shift, w_t, *, n, h, wc):
    return pl.pallas_call(
        bn_relu_conv_stats_kernel,
        grid=(n,),
        in_specs=[
            pl.BlockSpec((1, h, wc), lambda i: (i, 0, 0)),
            pl.BlockSpec((1, wc), lambda i: (0, 0)),             # resident
            pl.BlockSpec((1, wc), lambda i: (0, 0)),             # resident
            pl.BlockSpec((3, wc, wc), lambda i: (0, 0, 0)),      # resident weight
        ],
        out_specs=[
            pl.BlockSpec((1, h, wc), lambda i: (i, 0, 0)),
            pl.BlockSpec((1, 2, wc), lambda i: (i, 0, 0)),
        ],
        out_shape=(jax.ShapeDtypeStruct((n, h, wc), jnp.float32),
                   jax.ShapeDtypeStruct((n, 2, wc), jnp.float32)),
        scratch_shapes=[pltpu.VMEM((h + 2, wc), jnp.bfloat16)],
        compiler_params=_compiler_params(),
    )(y1, scale, shift, w_t)


def _bn_add_relu_stage(y, scale, shift, ident, *, n, h, wc):
    return pl.pallas_call(
        bn_add_relu_kernel,
        grid=(n,),
        in_specs=[
            pl.BlockSpec((1, h, wc), lambda i: (i, 0, 0)),
            pl.BlockSpec((1, wc), lambda i: (0, 0)),
            pl.BlockSpec((1, wc), lambda i: (0, 0)),
            pl.BlockSpec((1, h, wc), lambda i: (i, 0, 0)),
        ],
        out_specs=pl.BlockSpec((1, h, wc), lambda i: (i, 0, 0)),
        out_shape=jax.ShapeDtypeStruct((n, h, wc), jnp.float32),
        compiler_params=_compiler_params(),
    )(y, scale, shift, ident)


# ----------------------------------------------------------------------------
# Wrapper glue: weight re-layout + O(C) BN statistics fold
# ----------------------------------------------------------------------------
def _toeplitz_weight(w_oihw, width, dtype=jnp.bfloat16):
    # (Cout, Cin, 3, 3) conv weight -> (3, W*Cin, W*Cout) block-Toeplitz slabs.
    # Horizontal zero-padding of the conv is encoded as zero blocks.
    cin, cout = w_oihw.shape[1], w_oihw.shape[0]
    k = jnp.transpose(w_oihw, (2, 3, 1, 0))              # (dy, dx, cin, cout)
    wi = jnp.arange(width)[:, None]                      # input column
    wo = jnp.arange(width)[None, :]                      # output column
    dx = wi - wo + 1                                     # horizontal tap index
    valid = (dx >= 0) & (dx <= 2)
    t = k[:, jnp.clip(dx, 0, 2), :, :]                   # (3, W, W, cin, cout)
    t = t * valid[None, :, :, None, None]
    t = jnp.transpose(t, (0, 1, 3, 2, 4))                # (3, W, cin, W, cout)
    return t.reshape(3, width * cin, width * cout).astype(dtype)


def _bn_affine(stats, gamma, beta, m_total, width, c, eps=1e-5):
    # stats: (N, 2, W*C) per-image per-lane [sum, sumsq] -> GLOBAL per-channel
    # mean / biased variance (BN training mode), expanded back to the lane axis
    # as (1, W*C) scale/shift vectors.  O(C) glue between pallas_calls.
    s = stats.reshape(stats.shape[0], 2, width, c).sum(axis=(0, 2))   # (2, C)
    mean = s[0] / m_total
    var = s[1] / m_total - mean * mean
    scale_c = gamma * jax.lax.rsqrt(var + eps)
    shift_c = beta - mean * scale_c
    return (jnp.tile(scale_c, width).reshape(1, width * c),
            jnp.tile(shift_c, width).reshape(1, width * c))


# ----------------------------------------------------------------------------
# Block forward (stride=1, i_downsample=None)
# ----------------------------------------------------------------------------
@jax.jit
def block_forward(x_nchw, w1, w2, gamma2, beta2):
    n, c, h, w = x_nchw.shape
    assert w1.shape[0] == w1.shape[1] == c, "residual path requires c_in == c_out"
    wc = w * c
    m_total = n * h * w
    # NOTE: for large H/W add an H-tile grid axis with halo rows; one image per
    # grid step is plenty for ResNet-sized images and keeps blocks lane-dense.

    x_nhwc = jnp.transpose(x_nchw, (0, 2, 3, 1)).astype(jnp.float32)
    x_flat = x_nhwc.reshape(n, h, wc)                                  # identity (f32)
    x_pad = jnp.pad(x_flat, ((0, 0), (1, 1), (0, 0))).astype(jnp.bfloat16)

    w1_t = _toeplitz_weight(w1, w)
    w2_t = _toeplitz_weight(w2, w)
    g2 = gamma2.astype(jnp.float32)
    b2 = beta2.astype(jnp.float32)

    # stage 1: conv1 + global BN stats
    y1_raw, stats1 = _conv_stage(x_pad, w1_t, n=n, h=h, wc=wc)
    scale1, shift1 = _bn_affine(stats1, g2, b2, m_total, w, c)

    # stage 2: relu(bn2(conv1)) fused into conv2 + its global BN stats
    y2_raw, stats2 = _bn_relu_conv_stage(y1_raw, scale1, shift1, w2_t,
                                         n=n, h=h, wc=wc)
    scale2, shift2 = _bn_affine(stats2, g2, b2, m_total, w, c)

    # stage 3: bn2(conv2) + identity, relu
    out_flat = _bn_add_relu_stage(y2_raw, scale2, shift2, x_flat, n=n, h=h, wc=wc)

    out_nhwc = out_flat.reshape(n, h, w, c)
    return jnp.transpose(out_nhwc, (0, 3, 1, 2))                       # back to NCHW


# ----------------------------------------------------------------------------
# Pure-JAX reference (for verification)
# ----------------------------------------------------------------------------
def _ref_block(x, w1, w2, gamma2, beta2):
    def conv(inp, wgt):
        return jax.lax.conv_general_dilated(
            inp, wgt, window_strides=(1, 1), padding="SAME",
            dimension_numbers=("NCHW", "OIHW", "NCHW"))

    def bn(inp, g, b, eps=1e-5):
        mu = inp.mean(axis=(0, 2, 3), keepdims=True)
        var = inp.var(axis=(0, 2, 3), keepdims=True)   # biased, like BN training mode
        return (inp - mu) / jnp.sqrt(var + eps) * g.reshape(1, -1, 1, 1) \
            + b.reshape(1, -1, 1, 1)

    identity = x
    y = jax.nn.relu(bn(conv(x, w1), gamma2, beta2))
    y = bn(conv(y, w2), gamma2, beta2)
    return jax.nn.relu(y + identity)


if __name__ == "__main__":
    # Small shapes: batch=2, in_channels=out_channels=8, spatial=16x16 -> W*C=128 lanes.
    N, C, H, W = 2, 8, 16, 16

    key = jax.random.PRNGKey(0)
    k1, k2, k3, k4, kx = jax.random.split(key, 5)

    # conv weights (Cout, Cin, 3, 3), bias=False in the module
    w1 = jax.random.normal(k1, (C, C, 3, 3), jnp.float32) * 0.1
    w2 = jax.random.normal(k2, (C, C, 3, 3), jnp.float32) * 0.1
    # batch_norm2 affine params (batch_norm1 exists in __init__ but is unused in forward)
    gamma2 = 1.0 + 0.1 * jax.random.normal(k3, (C,), jnp.float32)
    beta2 = 0.05 * jax.random.normal(k4, (C,), jnp.float32)

    x = jax.random.normal(kx, (N, C, H, W), jnp.float32)

    out = jax.block_until_ready(block_forward(x, w1, w2, gamma2, beta2))
    ref = jax.block_until_ready(_ref_block(x, w1, w2, gamma2, beta2))

    assert out.shape == (N, C, H, W)
    # bf16 MXU operands vs an all-f32 reference -> relaxed tolerance
    err = jnp.max(jnp.abs(out - ref))
    assert jnp.allclose(out, ref, atol=5e-2, rtol=5e-2), f"max abs err {err}"

    print("KERNEL_OK")
</pallas_src>

<mosaic_0001>
module attributes {stable_mosaic.version = 11 : i64} {
  func.func @conv_stats_kernel(%arg0: i32, %arg1: memref<1x18x128xbf16, #tpu.memory_space<vmem>>, %arg2: memref<3x128x128xbf16, #tpu.memory_space<vmem>>, %arg3: memref<1x16x128xf32, #tpu.memory_space<vmem>>, %arg4: memref<1x2x128xf32, #tpu.memory_space<vmem>>) attributes {dimension_semantics = [#tpu.dimension_semantics<parallel>], iteration_bounds = array<i64: 2>, scalar_prefetch = 0 : i64, scratch_operands = 0 : i64, tpu.core_type = #tpu.core_type<tc>, window_params = [{transform_indices = @transform_0, window_bounds = array<i64: 1, 18, 128>}, {pipeline_mode = #tpu.pipeline_mode<synchronous>, transform_indices = @transform_1, window_bounds = array<i64: 3, 128, 128>}, {transform_indices = @transform_2, window_bounds = array<i64: 1, 16, 128>}, {transform_indices = @transform_3, window_bounds = array<i64: 1, 2, 128>}]} {
    %c0 = arith.constant 0 : index
    %c0_0 = arith.constant 0 : index
    %c0_1 = arith.constant 0 : index
    %0 = vector.load %arg1[%c0, %c0_0, %c0_1] : memref<1x18x128xbf16, #tpu.memory_space<vmem>>, vector<1x18x128xbf16>
    %1 = vector.shape_cast %0 : vector<1x18x128xbf16> to vector<18x128xbf16>
    %cst = arith.constant 0.000000e+00 : f32
    %2 = vector.broadcast %cst : f32 to vector<16x128xf32>
    %3 = vector.extract_strided_slice %1 {offsets = [0, 0], sizes = [16, 128], strides = [1, 1]} : vector<18x128xbf16> to vector<16x128xbf16>
    %c0_2 = arith.constant 0 : index
    %c0_3 = arith.constant 0 : index
    %c0_4 = arith.constant 0 : index
    %4 = vector.load %arg2[%c0_2, %c0_3, %c0_4] : memref<3x128x128xbf16, #tpu.memory_space<vmem>>, vector<1x128x128xbf16>
    %5 = vector.shape_cast %4 : vector<1x128x128xbf16> to vector<128x128xbf16>
    %cst_5 = arith.constant dense<0.000000e+00> : vector<16x128xf32>
    %6 = tpu.matmul %3, %5, %cst_5 {dimension_numbers = #tpu.dot_dimension_numbers<[1], [0], [0], [1], [0, 0, 1, 1], [], []>} : vector<16x128xbf16>, vector<128x128xbf16>, vector<16x128xf32> -> vector<16x128xf32>
    %7 = arith.addf %2, %6 : vector<16x128xf32>
    %8 = vector.extract_strided_slice %1 {offsets = [1, 0], sizes = [16, 128], strides = [1, 1]} : vector<18x128xbf16> to vector<16x128xbf16>
    %c1 = arith.constant 1 : index
    %c0_6 = arith.constant 0 : index
    %c0_7 = arith.constant 0 : index
    %9 = vector.load %arg2[%c1, %c0_6, %c0_7] : memref<3x128x128xbf16, #tpu.memory_space<vmem>>, vector<1x128x128xbf16>
    %10 = vector.shape_cast %9 : vector<1x128x128xbf16> to vector<128x128xbf16>
    %cst_8 = arith.constant dense<0.000000e+00> : vector<16x128xf32>
    %11 = tpu.matmul %8, %10, %cst_8 {dimension_numbers = #tpu.dot_dimension_numbers<[1], [0], [0], [1], [0, 0, 1, 1], [], []>} : vector<16x128xbf16>, vector<128x128xbf16>, vector<16x128xf32> -> vector<16x128xf32>
    %12 = arith.addf %7, %11 : vector<16x128xf32>
    %13 = vector.extract_strided_slice %1 {offsets = [2, 0], sizes = [16, 128], strides = [1, 1]} : vector<18x128xbf16> to vector<16x128xbf16>
    %c2 = arith.constant 2 : index
    %c0_9 = arith.constant 0 : index
    %c0_10 = arith.constant 0 : index
    %14 = vector.load %arg2[%c2, %c0_9, %c0_10] : memref<3x128x128xbf16, #tpu.memory_space<vmem>>, vector<1x128x128xbf16>
    %15 = vector.shape_cast %14 : vector<1x128x128xbf16> to vector<128x128xbf16>
    %cst_11 = arith.constant dense<0.000000e+00> : vector<16x128xf32>
    %16 = tpu.matmul %13, %15, %cst_11 {dimension_numbers = #tpu.dot_dimension_numbers<[1], [0], [0], [1], [0, 0, 1, 1], [], []>} : vector<16x128xbf16>, vector<128x128xbf16>, vector<16x128xf32> -> vector<16x128xf32>
    %17 = arith.addf %12, %16 : vector<16x128xf32>
    %c0_12 = arith.constant 0 : index
    %c0_13 = arith.constant 0 : index
    %c0_14 = arith.constant 0 : index
    %18 = vector.load %arg3[%c0_12, %c0_13, %c0_14] : memref<1x16x128xf32, #tpu.memory_space<vmem>>, vector<1x16x128xf32>
    %19 = vector.shape_cast %18 : vector<1x16x128xf32> to vector<16x128xf32>
    %20 = vector.shape_cast %17 : vector<16x128xf32> to vector<1x16x128xf32>
    tpu.vector_store %arg3[%c0_12, %c0_13, %c0_14], %20 {strides = array<i32>} : memref<1x16x128xf32, #tpu.memory_space<vmem>>, vector<1x16x128xf32>,
    %cst_15 = arith.constant dense<0.000000e+00> : vector<128xf32>
    %21 = vector.multi_reduction <add>, %17, %cst_15 [0] : vector<16x128xf32> to vector<128xf32>
    %22 = vector.shape_cast %21 : vector<128xf32> to vector<1x128xf32>
    %c0_16 = arith.constant 0 : index
    %c0_17 = arith.constant 0 : index
    %c0_18 = arith.constant 0 : index
    %23 = vector.load %arg4[%c0_16, %c0_17, %c0_18] : memref<1x2x128xf32, #tpu.memory_space<vmem>>, vector<1x1x128xf32>
    %24 = vector.shape_cast %23 : vector<1x1x128xf32> to vector<1x128xf32>
    %25 = vector.shape_cast %22 : vector<1x128xf32> to vector<1x1x128xf32>
    tpu.vector_store %arg4[%c0_16, %c0_17, %c0_18], %25 {strides = array<i32>} : memref<1x2x128xf32, #tpu.memory_space<vmem>>, vector<1x1x128xf32>,
    %26 = arith.mulf %17, %17 : vector<16x128xf32>
    %cst_19 = arith.constant dense<0.000000e+00> : vector<128xf32>
    %27 = vector.multi_reduction <add>, %26, %cst_19 [0] : vector<16x128xf32> to vector<128xf32>
    %28 = vector.shape_cast %27 : vector<128xf32> to vector<1x128xf32>
    %c0_20 = arith.constant 0 : index
    %c1_21 = arith.constant 1 : index
    %c0_22 = arith.constant 0 : index
    %29 = vector.load %arg4[%c0_20, %c1_21, %c0_22] : memref<1x2x128xf32, #tpu.memory_space<vmem>>, vector<1x1x128xf32>
    %30 = vector.shape_cast %29 : vector<1x1x128xf32> to vector<1x128xf32>
    %31 = vector.shape_cast %28 : vector<1x128xf32> to vector<1x1x128xf32>
    tpu.vector_store %arg4[%c0_20, %c1_21, %c0_22], %31 {strides = array<i32>} : memref<1x2x128xf32, #tpu.memory_space<vmem>>, vector<1x1x128xf32>,
    return
  }
  func.func @transform_0(%arg0: i32) -> (i32, i32, i32) {
    %c0_i32 = arith.constant 0 : i32
    %c0_i32_0 = arith.constant 0 : i32
    %c0_i32_1 = arith.constant 0 : i32
    return %arg0, %c0_i32, %c0_i32_0 : i32, i32, i32
  }
  func.func @transform_1(%arg0: i32) -> (i32, i32, i32) {
    %c0_i32 = arith.constant 0 : i32
    %c0_i32_0 = arith.constant 0 : i32
    %c0_i32_1 = arith.constant 0 : i32
    %c0_i32_2 = arith.constant 0 : i32
    return %c0_i32, %c0_i32_0, %c0_i32_1 : i32, i32, i32
  }
  func.func @transform_2(%arg0: i32) -> (i32, i32, i32) {
    %c0_i32 = arith.constant 0 : i32
    %c0_i32_0 = arith.constant 0 : i32
    %c0_i32_1 = arith.constant 0 : i32
    return %arg0, %c0_i32, %c0_i32_0 : i32, i32, i32
  }
  func.func @transform_3(%arg0: i32) -> (i32, i32, i32) {
    %c0_i32 = arith.constant 0 : i32
    %c0_i32_0 = arith.constant 0 : i32
    %c0_i32_1 = arith.constant 0 : i32
    return %arg0, %c0_i32, %c0_i32_0 : i32, i32, i32
  }
}

module attributes {stable_mosaic.version = 11 : i64} {
  func.func @bn_add_relu_kernel(%arg0: i32, %arg1: memref<1x16x128xf32, #tpu.memory_space<vmem>>, %arg2: memref<1x128xf32, #tpu.memory_space<vmem>>, %arg3: memref<1x128xf32, #tpu.memory_space<vmem>>, %arg4: memref<1x16x128xf32, #tpu.memory_space<vmem>>, %arg5: memref<1x16x128xf32, #tpu.memory_space<vmem>>) attributes {dimension_semantics = [#tpu.dimension_semantics<parallel>], iteration_bounds = array<i64: 2>, scalar_prefetch = 0 : i64, scratch_operands = 0 : i64, tpu.core_type = #tpu.core_type<tc>, window_params = [{transform_indices = @transform_0, window_bounds = array<i64: 1, 16, 128>}, {pipeline_mode = #tpu.pipeline_mode<synchronous>, transform_indices = @transform_1, window_bounds = array<i64: 1, 128>}, {pipeline_mode = #tpu.pipeline_mode<synchronous>, transform_indices = @transform_2, window_bounds = array<i64: 1, 128>}, {transform_indices = @transform_3, window_bounds = array<i64: 1, 16, 128>}, {transform_indices = @transform_4, window_bounds = array<i64: 1, 16, 128>}]} {
    %c0 = arith.constant 0 : index
    %c0_0 = arith.constant 0 : index
    %c0_1 = arith.constant 0 : index
    %0 = vector.load %arg1[%c0, %c0_0, %c0_1] : memref<1x16x128xf32, #tpu.memory_space<vmem>>, vector<1x16x128xf32>
    %1 = vector.shape_cast %0 : vector<1x16x128xf32> to vector<16x128xf32>
    %c0_2 = arith.constant 0 : index
    %c0_3 = arith.constant 0 : index
    %2 = vector.load %arg2[%c0_2, %c0_3] : memref<1x128xf32, #tpu.memory_space<vmem>>, vector<1x128xf32>
    %3 = vector.broadcast %2 : vector<1x128xf32> to vector<16x128xf32>
    %4 = arith.mulf %1, %3 : vector<16x128xf32>
    %c0_4 = arith.constant 0 : index
    %c0_5 = arith.constant 0 : index
    %5 = vector.load %arg3[%c0_4, %c0_5] : memref<1x128xf32, #tpu.memory_space<vmem>>, vector<1x128xf32>
    %6 = vector.broadcast %5 : vector<1x128xf32> to vector<16x128xf32>
    %7 = arith.addf %4, %6 : vector<16x128xf32>
    %c0_6 = arith.constant 0 : index
    %c0_7 = arith.constant 0 : index
    %c0_8 = arith.constant 0 : index
    %8 = vector.load %arg4[%c0_6, %c0_7, %c0_8] : memref<1x16x128xf32, #tpu.memory_space<vmem>>, vector<1x16x128xf32>
    %9 = vector.shape_cast %8 : vector<1x16x128xf32> to vector<16x128xf32>
    %10 = arith.addf %7, %9 : vector<16x128xf32>
    %cst = arith.constant 0.000000e+00 : f32
    %11 = vector.broadcast %cst : f32 to vector<16x128xf32>
    %12 = arith.maximumf %10, %11 : vector<16x128xf32>
    %c0_9 = arith.constant 0 : index
    %c0_10 = arith.constant 0 : index
    %c0_11 = arith.constant 0 : index
    %13 = vector.load %arg5[%c0_9, %c0_10, %c0_11] : memref<1x16x128xf32, #tpu.memory_space<vmem>>, vector<1x16x128xf32>
    %14 = vector.shape_cast %13 : vector<1x16x128xf32> to vector<16x128xf32>
    %15 = vector.shape_cast %12 : vector<16x128xf32> to vector<1x16x128xf32>
    tpu.vector_store %arg5[%c0_9, %c0_10, %c0_11], %15 {strides = array<i32>} : memref<1x16x128xf32, #tpu.memory_space<vmem>>, vector<1x16x128xf32>,
    return
  }
  func.func @transform_0(%arg0: i32) -> (i32, i32, i32) {
    %c0_i32 = arith.constant 0 : i32
    %c0_i32_0 = arith.constant 0 : i32
    %c0_i32_1 = arith.constant 0 : i32
    return %arg0, %c0_i32, %c0_i32_0 : i32, i32, i32
  }
  func.func @transform_1(%arg0: i32) -> (i32, i32) {
    %c0_i32 = arith.constant 0 : i32
    %c0_i32_0 = arith.constant 0 : i32
    %c0_i32_1 = arith.constant 0 : i32
    return %c0_i32, %c0_i32_0 : i32, i32
  }
  func.func @transform_2(%arg0: i32) -> (i32, i32) {
    %c0_i32 = arith.constant 0 : i32
    %c0_i32_0 = arith.constant 0 : i32
    %c0_i32_1 = arith.constant 0 : i32
    return %c0_i32, %c0_i32_0 : i32, i32
  }
  func.func @transform_3(%arg0: i32) -> (i32, i32, i32) {
    %c0_i32 = arith.constant 0 : i32
    %c0_i32_0 = arith.constant 0 : i32
    %c0_i32_1 = arith.constant 0 : i32
    return %arg0, %c0_i32, %c0_i32_0 : i32, i32, i32
  }
  func.func @transform_4(%arg0: i32) -> (i32, i32, i32) {
    %c0_i32 = arith.constant 0 : i32
    %c0_i32_0 = arith.constant 0 : i32
    %c0_i32_1 = arith.constant 0 : i32
    return %arg0, %c0_i32, %c0_i32_0 : i32, i32, i32
  }
}

module attributes {stable_mosaic.version = 11 : i64} {
  func.func @bn_relu_conv_stats_kernel(%arg0: i32, %arg1: memref<1x16x128xf32, #tpu.memory_space<vmem>>, %arg2: memref<1x128xf32, #tpu.memory_space<vmem>>, %arg3: memref<1x128xf32, #tpu.memory_space<vmem>>, %arg4: memref<3x128x128xbf16, #tpu.memory_space<vmem>>, %arg5: memref<1x16x128xf32, #tpu.memory_space<vmem>>, %arg6: memref<1x2x128xf32, #tpu.memory_space<vmem>>, %arg7: memref<18x128xbf16, #tpu.memory_space<vmem>>) attributes {dimension_semantics = [#tpu.dimension_semantics<parallel>], iteration_bounds = array<i64: 2>, scalar_prefetch = 0 : i64, scratch_operands = 1 : i64, tpu.core_type = #tpu.core_type<tc>, window_params = [{transform_indices = @transform_0, window_bounds = array<i64: 1, 16, 128>}, {pipeline_mode = #tpu.pipeline_mode<synchronous>, transform_indices = @transform_1, window_bounds = array<i64: 1, 128>}, {pipeline_mode = #tpu.pipeline_mode<synchronous>, transform_indices = @transform_2, window_bounds = array<i64: 1, 128>}, {pipeline_mode = #tpu.pipeline_mode<synchronous>, transform_indices = @transform_3, window_bounds = array<i64: 3, 128, 128>}, {transform_indices = @transform_4, window_bounds = array<i64: 1, 16, 128>}, {transform_indices = @transform_5, window_bounds = array<i64: 1, 2, 128>}]} {
    %c0 = arith.constant 0 : index
    %c0_0 = arith.constant 0 : index
    %c0_1 = arith.constant 0 : index
    %0 = vector.load %arg1[%c0, %c0_0, %c0_1] : memref<1x16x128xf32, #tpu.memory_space<vmem>>, vector<1x16x128xf32>
    %1 = vector.shape_cast %0 : vector<1x16x128xf32> to vector<16x128xf32>
    %c0_2 = arith.constant 0 : index
    %c0_3 = arith.constant 0 : index
    %2 = vector.load %arg2[%c0_2, %c0_3] : memref<1x128xf32, #tpu.memory_space<vmem>>, vector<1x128xf32>
    %3 = vector.broadcast %2 : vector<1x128xf32> to vector<16x128xf32>
    %4 = arith.mulf %1, %3 : vector<16x128xf32>
    %c0_4 = arith.constant 0 : index
    %c0_5 = arith.constant 0 : index
    %5 = vector.load %arg3[%c0_4, %c0_5] : memref<1x128xf32, #tpu.memory_space<vmem>>, vector<1x128xf32>
    %6 = vector.broadcast %5 : vector<1x128xf32> to vector<16x128xf32>
    %7 = arith.addf %4, %6 : vector<16x128xf32>
    %cst = arith.constant 0.000000e+00 : f32
    %8 = vector.broadcast %cst : f32 to vector<16x128xf32>
    %9 = arith.maximumf %7, %8 : vector<16x128xf32>
    %cst_6 = arith.constant 0.000000e+00 : bf16
    %10 = vector.broadcast %cst_6 : bf16 to vector<18x128xbf16>
    %c0_7 = arith.constant 0 : index
    %c0_8 = arith.constant 0 : index
    %11 = vector.load %arg7[%c0_7, %c0_8] : memref<18x128xbf16, #tpu.memory_space<vmem>>, vector<18x128xbf16>
    tpu.vector_store %arg7[%c0_7, %c0_8], %10 {strides = array<i32>} : memref<18x128xbf16, #tpu.memory_space<vmem>>, vector<18x128xbf16>,
    %12 = arith.truncf %9 : vector<16x128xf32> to vector<16x128xbf16>
    %c1 = arith.constant 1 : index
    %c0_9 = arith.constant 0 : index
    %13 = vector.load %arg7[%c1, %c0_9] : memref<18x128xbf16, #tpu.memory_space<vmem>>, vector<16x128xbf16>
    tpu.vector_store %arg7[%c1, %c0_9], %12 {strides = array<i32>} : memref<18x128xbf16, #tpu.memory_space<vmem>>, vector<16x128xbf16>,
    %cst_10 = arith.constant 0.000000e+00 : f32
    %14 = vector.broadcast %cst_10 : f32 to vector<16x128xf32>
    %c0_11 = arith.constant 0 : index
    %c0_12 = arith.constant 0 : index
    %15 = vector.load %arg7[%c0_11, %c0_12] : memref<18x128xbf16, #tpu.memory_space<vmem>>, vector<16x128xbf16>
    %c0_13 = arith.constant 0 : index
    %c0_14 = arith.constant 0 : index
    %c0_15 = arith.constant 0 : index
    %16 = vector.load %arg4[%c0_13, %c0_14, %c0_15] : memref<3x128x128xbf16, #tpu.memory_space<vmem>>, vector<1x128x128xbf16>
    %17 = vector.shape_cast %16 : vector<1x128x128xbf16> to vector<128x128xbf16>
    %cst_16 = arith.constant dense<0.000000e+00> : vector<16x128xf32>
    %18 = tpu.matmul %15, %17, %cst_16 {dimension_numbers = #tpu.dot_dimension_numbers<[1], [0], [0], [1], [0, 0, 1, 1], [], []>} : vector<16x128xbf16>, vector<128x128xbf16>, vector<16x128xf32> -> vector<16x128xf32>
    %19 = arith.addf %14, %18 : vector<16x128xf32>
    %c1_17 = arith.constant 1 : index
    %c0_18 = arith.constant 0 : index
    %20 = vector.load %arg7[%c1_17, %c0_18] : memref<18x128xbf16, #tpu.memory_space<vmem>>, vector<16x128xbf16>
    %c1_19 = arith.constant 1 : index
    %c0_20 = arith.constant 0 : index
    %c0_21 = arith.constant 0 : index
    %21 = vector.load %arg4[%c1_19, %c0_20, %c0_21] : memref<3x128x128xbf16, #tpu.memory_space<vmem>>, vector<1x128x128xbf16>
    %22 = vector.shape_cast %21 : vector<1x128x128xbf16> to vector<128x128xbf16>
    %cst_22 = arith.constant dense<0.000000e+00> : vector<16x128xf32>
    %23 = tpu.matmul %20, %22, %cst_22 {dimension_numbers = #tpu.dot_dimension_numbers<[1], [0], [0], [1], [0, 0, 1, 1], [], []>} : vector<16x128xbf16>, vector<128x128xbf16>, vector<16x128xf32> -> vector<16x128xf32>
    %24 = arith.addf %19, %23 : vector<16x128xf32>
    %c2 = arith.constant 2 : index
    %c0_23 = arith.constant 0 : index
    %25 = vector.load %arg7[%c2, %c0_23] : memref<18x128xbf16, #tpu.memory_space<vmem>>, vector<16x128xbf16>
    %c2_24 = arith.constant 2 : index
    %c0_25 = arith.constant 0 : index
    %c0_26 = arith.constant 0 : index
    %26 = vector.load %arg4[%c2_24, %c0_25, %c0_26] : memref<3x128x128xbf16, #tpu.memory_space<vmem>>, vector<1x128x128xbf16>
    %27 = vector.shape_cast %26 : vector<1x128x128xbf16> to vector<128x128xbf16>
    %cst_27 = arith.constant dense<0.000000e+00> : vector<16x128xf32>
    %28 = tpu.matmul %25, %27, %cst_27 {dimension_numbers = #tpu.dot_dimension_numbers<[1], [0], [0], [1], [0, 0, 1, 1], [], []>} : vector<16x128xbf16>, vector<128x128xbf16>, vector<16x128xf32> -> vector<16x128xf32>
    %29 = arith.addf %24, %28 : vector<16x128xf32>
    %c0_28 = arith.constant 0 : index
    %c0_29 = arith.constant 0 : index
    %c0_30 = arith.constant 0 : index
    %30 = vector.load %arg5[%c0_28, %c0_29, %c0_30] : memref<1x16x128xf32, #tpu.memory_space<vmem>>, vector<1x16x128xf32>
    %31 = vector.shape_cast %30 : vector<1x16x128xf32> to vector<16x128xf32>
    %32 = vector.shape_cast %29 : vector<16x128xf32> to vector<1x16x128xf32>
    tpu.vector_store %arg5[%c0_28, %c0_29, %c0_30], %32 {strides = array<i32>} : memref<1x16x128xf32, #tpu.memory_space<vmem>>, vector<1x16x128xf32>,
    %cst_31 = arith.constant dense<0.000000e+00> : vector<128xf32>
    %33 = vector.multi_reduction <add>, %29, %cst_31 [0] : vector<16x128xf32> to vector<128xf32>
    %34 = vector.shape_cast %33 : vector<128xf32> to vector<1x128xf32>
    %c0_32 = arith.constant 0 : index
    %c0_33 = arith.constant 0 : index
    %c0_34 = arith.constant 0 : index
    %35 = vector.load %arg6[%c0_32, %c0_33, %c0_34] : memref<1x2x128xf32, #tpu.memory_space<vmem>>, vector<1x1x128xf32>
    %36 = vector.shape_cast %35 : vector<1x1x128xf32> to vector<1x128xf32>
    %37 = vector.shape_cast %34 : vector<1x128xf32> to vector<1x1x128xf32>
    tpu.vector_store %arg6[%c0_32, %c0_33, %c0_34], %37 {strides = array<i32>} : memref<1x2x128xf32, #tpu.memory_space<vmem>>, vector<1x1x128xf32>,
    %38 = arith.mulf %29, %29 : vector<16x128xf32>
    %cst_35 = arith.constant dense<0.000000e+00> : vector<128xf32>
    %39 = vector.multi_reduction <add>, %38, %cst_35 [0] : vector<16x128xf32> to vector<128xf32>
    %40 = vector.shape_cast %39 : vector<128xf32> to vector<1x128xf32>
    %c0_36 = arith.constant 0 : index
    %c1_37 = arith.constant 1 : index
    %c0_38 = arith.constant 0 : index
    %41 = vector.load %arg6[%c0_36, %c1_37, %c0_38] : memref<1x2x128xf32, #tpu.memory_space<vmem>>, vector<1x1x128xf32>
    %42 = vector.shape_cast %41 : vector<1x1x128xf32> to vector<1x128xf32>
    %43 = vector.shape_cast %40 : vector<1x128xf32> to vector<1x1x128xf32>
    tpu.vector_store %arg6[%c0_36, %c1_37, %c0_38], %43 {strides = array<i32>} : memref<1x2x128xf32, #tpu.memory_space<vmem>>, vector<1x1x128xf32>,
    return
  }
  func.func @transform_0(%arg0: i32) -> (i32, i32, i32) {
    %c0_i32 = arith.constant 0 : i32
    %c0_i32_0 = arith.constant 0 : i32
    %c0_i32_1 = arith.constant 0 : i32
    return %arg0, %c0_i32, %c0_i32_0 : i32, i32, i32
  }
  func.func @transform_1(%arg0: i32) -> (i32, i32) {
    %c0_i32 = arith.constant 0 : i32
    %c0_i32_0 = arith.constant 0 : i32
    %c0_i32_1 = arith.constant 0 : i32
    return %c0_i32, %c0_i32_0 : i32, i32
  }
  func.func @transform_2(%arg0: i32) -> (i32, i32) {
    %c0_i32 = arith.constant 0 : i32
    %c0_i32_0 = arith.constant 0 : i32
    %c0_i32_1 = arith.constant 0 : i32
    return %c0_i32, %c0_i32_0 : i32, i32
  }
  func.func @transform_3(%arg0: i32) -> (i32, i32, i32) {
    %c0_i32 = arith.constant 0 : i32
    %c0_i32_0 = arith.constant 0 : i32
    %c0_i32_1 = arith.constant 0 : i32
    %c0_i32_2 = arith.constant 0 : i32
    return %c0_i32, %c0_i32_0, %c0_i32_1 : i32, i32, i32
  }
  func.func @transform_4(%arg0: i32) -> (i32, i32, i32) {
    %c0_i32 = arith.constant 0 : i32
    %c0_i32_0 = arith.constant 0 : i32
    %c0_i32_1 = arith.constant 0 : i32
    return %arg0, %c0_i32, %c0_i32_0 : i32, i32, i32
  }
  func.func @transform_5(%arg0: i32) -> (i32, i32, i32) {
    %c0_i32 = arith.constant 0 : i32
    %c0_i32_0 = arith.constant 0 : i32
    %c0_i32_1 = arith.constant 0 : i32
    return %arg0, %c0_i32, %c0_i32_0 : i32, i32, i32
  }
}

</mosaic_0001>

<llo_original>
// kernel: tile.23
$region0: #{tile.23}
  #allocation0 [shape = 's32[1]{0}', space=sflag, size = 0x4, scoped, tag = 'scoped memory for tile.23']
  %s0 = inlined_call_operand.vmem [shape: f32[8], index: 0, kind: input, shape index: {}]
  %s1 = inlined_call_operand.vmem [shape: f32[16,8], index: 1, kind: output, shape index: {}]
  // Predicated region
  $region2: #{tile.23} parent=0 // pred_check
    _
  $region3: #{tile.23} parent=0 // pred_check_branch
    %3 = sbr.rel (0) target = $region5
  $region4: #{tile.23} parent=0 // pred_region
    _
  $region5: #{tile.23} parent=0 // pred_fallthru
    _
  %v4 = vld [vmem:[%s0] ss:$0 sm:$0xff]
  %5 = vst [vmem:[%s1] sm:$0xff] %v4
  %s6 = scalar_lea.vmem %s1, 8
  %7 = vst [vmem:[%s6] sm:$0xff] %v4

// kernel: tile.24
$region0: #{tile.24}
  %s0 = inlined_call_operand.vmem [shape: f32[16,8], index: 0, kind: input, shape index: {}]
  %s1 = inlined_call_operand.vmem [shape: f32[1,128], index: 1, kind: output, shape index: {}]
  $region1: #{tile.24} parent=0
    #allocation0 [shape = 'u8[4096]{0}', space=vmem, size = 0x1000, scoped, tag = 'scoped mem for output reshape']
    %v2 = vld [vmem:[%s0] sm:$0x1]
    %vm3 = vcmask 64512
    %4 = vst.msk [vmem:[#allocation0] sm:$0x1] %vm3, %v2
    %s5 = scalar_lea.vmem %s0, 15
    %v6 = vld [vmem:[%s5] sm:$0x1]
    %7 = vrot.lane.b32.xlu0 %v6, 120
    %v8 = vpop.permute.xlu0 %7
    %vm9 = vcmask 1048512
    %10 = vst.msk [vmem:[#allocation0] sm:$0x1] %vm9, %v8
    %s11 = scalar_lea.vmem %s0, 14
    %v12 = vld [vmem:[%s11] sm:$0x1]
    %13 = vrot.lane.b32.xlu0 %v12, 112
    %v14 = vpop.permute.xlu0 %13
    %vm15 = vcmask 982912
    %16 = vst.msk [vmem:[#allocation0] sm:$0x1] %vm15, %v14
    %s17 = scalar_lea.vmem %s0, 13
    %v18 = vld [vmem:[%s17] sm:$0x1]
    %19 = vrot.lane.b32.xlu0 %v18, 104
    %v20 = vpop.permute.xlu0 %19
    %vm21 = vcmask 917312
    %22 = vst.msk [vmem:[#allocation0] sm:$0x1] %vm21, %v20
    %s23 = scalar_lea.vmem %s0, 12
    %v24 = vld [vmem:[%s23] sm:$0x1]
    %25 = vrot.lane.b32.xlu0 %v24, 96
    %v26 = vpop.permute.xlu0 %25
    %vm27 = vcmask 851712
    %28 = vst.msk [vmem:[#allocation0] sm:$0x1] %vm27, %v26
    %s29 = scalar_lea.vmem %s0, 11
    %v30 = vld [vmem:[%s29] sm:$0x1]
    %31 = vrot.lane.b32.xlu0 %v30, 88
    %v32 = vpop.permute.xlu0 %31
    %vm33 = vcmask 786112
    %34 = vst.msk [vmem:[#allocation0] sm:$0x1] %vm33, %v32
    %s35 = scalar_lea.vmem %s0, 10
    %v36 = vld [vmem:[%s35] sm:$0x1]
    %37 = vrot.lane.b32.xlu0 %v36, 80
    %v38 = vpop.permute.xlu0 %37
    %vm39 = vcmask 720512
    %40 = vst.msk [vmem:[#allocation0] sm:$0x1] %vm39, %v38
    %s41 = scalar_lea.vmem %s0, 9
    %v42 = vld [vmem:[%s41] sm:$0x1]
    %43 = vrot.lane.b32.xlu0 %v42, 72
    %v44 = vpop.permute.xlu0 %43
    %vm45 = vcmask 654912
    %46 = vst.msk [vmem:[#allocation0] sm:$0x1] %vm45, %v44
    %s47 = scalar_lea.vmem %s0, 8
    %v48 = vld [vmem:[%s47] sm:$0x1]
    %49 = vrot.lane.b32.xlu0 %v48, 64
    %v50 = vpop.permute.xlu0 %49
    %vm51 = vcmask 589312
    %52 = vst.msk [vmem:[#allocation0] sm:$0x1] %vm51, %v50
    %s53 = scalar_lea.vmem %s0, 7
    %v54 = vld [vmem:[%s53] sm:$0x1]
    %55 = vrot.lane.b32.xlu0 %v54, 56
    %v56 = vpop.permute.xlu0 %55
    %vm57 = vcmask 523712
    %58 = vst.msk [vmem:[#allocation0] sm:$0x1] %vm57, %v56
    %s59 = scalar_lea.vmem %s0, 6
    %v60 = vld [vmem:[%s59] sm:$0x1]
    %61 = vrot.lane.b32.xlu0 %v60, 48
    %v62 = vpop.permute.xlu0 %61
    %vm63 = vcmask 458112
    %64 = vst.msk [vmem:[#allocation0] sm:$0x1] %vm63, %v62
    %s65 = scalar_lea.vmem %s0, 5
    %v66 = vld [vmem:[%s65] sm:$0x1]
    %67 = vrot.lane.b32.xlu0 %v66, 40
    %v68 = vpop.permute.xlu0 %67
    %vm69 = vcmask 392512
    %70 = vst.msk [vmem:[#allocation0] sm:$0x1] %vm69, %v68
    %s71 = scalar_lea.vmem %s0, 4
    %v72 = vld [vmem:[%s71] sm:$0x1]
    %73 = vrot.lane.b32.xlu0 %v72, 32
    %v74 = vpop.permute.xlu0 %73
    %vm75 = vcmask 326912
    %76 = vst.msk [vmem:[#allocation0] sm:$0x1] %vm75, %v74
    %s77 = scalar_lea.vmem %s0, 3
    %v78 = vld [vmem:[%s77] sm:$0x1]
    %79 = vrot.lane.b32.xlu0 %v78, 24
    %v80 = vpop.permute.xlu0 %79
    %vm81 = vcmask 261312
    %82 = vst.msk [vmem:[#allocation0] sm:$0x1] %vm81, %v80
    %s83 = scalar_lea.vmem %s0, 2
    %v84 = vld [vmem:[%s83] sm:$0x1]
    %85 = vrot.lane.b32.xlu0 %v84, 16
    %v86 = vpop.permute.xlu0 %85
    %vm87 = vcmask 195712
    %88 = vst.msk [vmem:[#allocation0] sm:$0x1] %vm87, %v86
    %s89 = scalar_lea.vmem %s0, 1
    %v90 = vld [vmem:[%s89] sm:$0x1]
    %91 = vrot.lane.b32.xlu0 %v90, 8
    %v92 = vpop.permute.xlu0 %91
    %vm93 = vcmask 130112
    %94 = vst.msk [vmem:[#allocation0] sm:$0x1] %vm93, %v92
    %s96 = sshll.u32 1, 1
    %s97 = ssub.s32 %s96, 1
    %v99 = vld [vmem:[#allocation0] sm:%s97]
    %s100 = sshll.u32 1, 1
    %s101 = ssub.s32 %s100, 1
    %102 = vst [vmem:[%s1] sm:%s101] %v99

// kernel: block_forward.3
$region0: #{block_forward.3}
  #allocation0 [shape = 'u32[]', space=smem, size = 0x4, offset = 0x4, fixed_abs, tag = 'smem constant byte address 0x4 - core index']
  #allocation1 [shape = 'u32[144,128]{1,0:T(1,128)}', space=vmem, size = 0x12000, scoped, tag = 'internal scratch']
  %s0 = inlined_call_operand.vmem [shape: bf16[2,18,128], index: 0, kind: input, shape index: {}]
  %s1 = inlined_call_operand.vmem [shape: bf16[3,128,128], index: 1, kind: input, shape index: {}]
  %s2 = inlined_call_operand.vmem [shape: f32[2,16,128], index: 2, kind: output, shape index: {0}]
  %s3 = inlined_call_operand.vmem [shape: f32[2,2,128], index: 3, kind: output, shape index: {1}]
  %4 = xla_tuple %s2, %s3
  %s5 = sld [smem:[#allocation0]]
  $region49: #{block_forward.3} parent=0
    _
  %s7 = ssub.s32 1, %s5
  %s8 = scalar_select 0, %s7, %s5
  loop: start=0, step=1, limit=4
  $region2: #{block_forward.3} parent=0 // loop_pre_header
    _
  $region3: #{block_forward.3} parent=0 // loop_header
    %s10 = sphi 0, %s14
    %p11 = scmp.ge.s32.totalorder %s10, 4
    %s20 = sphi 0, %s22
    %s23 = sphi 0, %s20
    %s24 = sphi 0, %s23
    %s40 = sphi 0, %s24
    %s44 = sphi 0, %s44
    %s46 = sphi 0, %s44
    %s47 = sphi 0, %s46
    %s61 = sphi 0, %s47
    %s67 = sphi 0, %s69
    %s70 = sphi 0, %s67
    %s71 = sphi 0, %s70
    %s87 = sphi 0, %s71
    %s93 = sphi 0, %s95
    %s96 = sphi 0, %s93
    %s97 = sphi 0, %s96
    %s113 = sphi 0, %s97
  $region4: #{block_forward.3} parent=0 // loop_header_branch
    %13 = sbr.rel (%p11) target = $region8
  $region5: #{block_forward.3} parent=0 // loop_body
    %s15 = ssub.s32 %s10, 1
    %s16 = ssub.s32 %s10, 2
    %s17 = sadd.s32 %s10, 1
    %s18 = ssub.s32 %s10, %s17
    %p19 = scmp.eq.s32.totalorder %s18, 0
    %s21 = sadd.s32 %s20, 1
    %s22 = scalar_select %p19, %s20, %s21
    %p25 = pneg %p19
    %p26 = scmp.eq.s32.totalorder %s10, 1
    %p27 = por %p25, %p26
    %p28 = scmp.ne.s32.totalorder %s20, %s23
    %p29 = scmp.eq.s32.totalorder %s10, 0
    %p30 = por %p28, %p29
    %p31 = scmp.ne.s32.totalorder %s20, %s23
    %p32 = scmp.eq.s32.totalorder %s15, 1
    %p33 = por %p31, %p32
    %p34 = scmp.ne.s32.totalorder %s23, %s24
    %p35 = scmp.eq.s32.totalorder %s15, 0
    %p36 = por %p34, %p35
    %p37 = scmp.ne.s32.totalorder %s23, %s24
    %p38 = scmp.eq.s32.totalorder %s16, 1
    %p39 = por %p37, %p38
    %p41 = scmp.ne.s32.totalorder %s24, %s40
    %p42 = scmp.eq.s32.totalorder %s16, 0
    %p43 = por %p41, %p42
    %s45 = sadd.s32 %s44, 1
    %p48 = scmp.eq.s32.totalorder %s10, 1
    %p49 = scmp.ne.s32.totalorder %s44, %s46
    %p50 = scmp.eq.s32.totalorder %s10, 0
    %p51 = por %p49, %p50
    %p52 = scmp.ne.s32.totalorder %s44, %s46
    %p53 = scmp.eq.s32.totalorder %s15, 1
    %p54 = por %p52, %p53
    %p55 = scmp.ne.s32.totalorder %s46, %s47
    %p56 = scmp.eq.s32.totalorder %s15, 0
    %p57 = por %p55, %p56
    %p58 = scmp.ne.s32.totalorder %s46, %s47
    %p59 = scmp.eq.s32.totalorder %s16, 1
    %p60 = por %p58, %p59
    %p62 = scmp.ne.s32.totalorder %s47, %s61
    %p63 = scmp.eq.s32.totalorder %s16, 0
    %p64 = por %p62, %p63
    %s65 = ssub.s32 %s10, %s17
    %p66 = scmp.eq.s32.totalorder %s65, 0
    %s68 = sadd.s32 %s67, 1
    %s69 = scalar_select %p66, %s67, %s68
    %p72 = pneg %p66
    %p73 = scmp.eq.s32.totalorder %s10, 1
    %p74 = por %p72, %p73
    %p75 = scmp.ne.s32.totalorder %s67, %s70
    %p76 = scmp.eq.s32.totalorder %s10, 0
    %p77 = por %p75, %p76
    %p78 = scmp.ne.s32.totalorder %s67, %s70
    %p79 = scmp.eq.s32.totalorder %s15, 1
    %p80 = por %p78, %p79
    %p81 = scmp.ne.s32.totalorder %s70, %s71
    %p82 = scmp.eq.s32.totalorder %s15, 0
    %p83 = por %p81, %p82
    %p84 = scmp.ne.s32.totalorder %s70, %s71
    %p85 = scmp.eq.s32.totalorder %s16, 1
    %p86 = por %p84, %p85
    %p88 = scmp.ne.s32.totalorder %s71, %s87
    %p89 = scmp.eq.s32.totalorder %s16, 0
    %p90 = por %p88, %p89
    %s91 = ssub.s32 %s10, %s17
    %p92 = scmp.eq.s32.totalorder %s91, 0
    %s94 = sadd.s32 %s93, 1
    %s95 = scalar_select %p92, %s93, %s94
    %p98 = pneg %p92
    %p99 = scmp.eq.s32.totalorder %s10, 1
    %p100 = por %p98, %p99
    %p101 = scmp.ne.s32.totalorder %s93, %s96
    %p102 = scmp.eq.s32.totalorder %s10, 0
    %p103 = por %p101, %p102
    %p104 = scmp.ne.s32.totalorder %s93, %s96
    %p105 = scmp.eq.s32.totalorder %s15, 1
    %p106 = por %p104, %p105
    %p107 = scmp.ne.s32.totalorder %s96, %s97
    %p108 = scmp.eq.s32.totalorder %s15, 0
    %p109 = por %p107, %p108
    %p110 = scmp.ne.s32.totalorder %s96, %s97
    %p111 = scmp.eq.s32.totalorder %s16, 1
    %p112 = por %p110, %p111
    %p114 = scmp.ne.s32.totalorder %s97, %s113
    %p115 = scmp.eq.s32.totalorder %s16, 0
    %p116 = por %p114, %p115
    %p117 = scmp.le.s32.totalorder 1, %s10
    %p118 = scmp.lt.s32.totalorder %s10, 3
    %p119 = pnand %p117, %p118
    %p120 = pneg %p119
    // Predicated region
    $region9: #{block_forward.3} parent=5 // pred_check
      _
    $region10: #{block_forward.3} parent=5 // pred_check_branch
      %122 = sbr.rel (%p119) target = $region12
    $region11: #{block_forward.3} parent=5 // pred_region
      %s123 = ssub.s32 %s10, 1
      // Predicated region
      $region13: #{block_forward.3} parent=11 // pred_check
        %p124 = pneg %p57
      $region14: #{block_forward.3} parent=11 // pred_check_branch
        %126 = sbr.rel (%p124) target = $region16
      $region15: #{block_forward.3} parent=11 // pred_region
        _
      $region16: #{block_forward.3} parent=11 // pred_fallthru
        _
    $region12: #{block_forward.3} parent=5 // pred_fallthru
      _
    %p127 = scmp.lt.s32.totalorder %s10, 2
    // Predicated region
    $region17: #{block_forward.3} parent=5 // pred_check
      %p128 = pneg %p127
    $region18: #{block_forward.3} parent=5 // pred_check_branch
      %130 = sbr.rel (%p128) target = $region20
    $region19: #{block_forward.3} parent=5 // pred_region
      // Predicated region
      $region21: #{block_forward.3} parent=19 // pred_check
        %p131 = pneg %p30
      $region22: #{block_forward.3} parent=19 // pred_check_branch
        %133 = sbr.rel (%p131) target = $region24
      $region23: #{block_forward.3} parent=19 // pred_region
        %p134 = scmp.lt.s32.totalorder %s10, 1
        %s135 = scalar_select %p134, %s10, 1
        %s136 = smul.addr %s135, 3
        %s137 = smul.addr %s136, 4
        %s138 = scalar_lea.vmem %s0, %s137
      $region24: #{block_forward.3} parent=19 // pred_fallthru
        _
    $region20: #{block_forward.3} parent=5 // pred_fallthru
      _
    %p139 = scmp.le.s32.totalorder 1, %s10
    %p140 = scmp.lt.s32.totalorder %s10, 3
    %p141 = pnand %p139, %p140
    %p142 = pneg %p141
    // Predicated region
    $region25: #{block_forward.3} parent=5 // pred_check
      _
    $region26: #{block_forward.3} parent=5 // pred_check_branch
      %144 = sbr.rel (%p141) target = $region28
    $region27: #{block_forward.3} parent=5 // pred_region
      %s145 = ssub.s32 %s10, 1
      %p146 = scmp.lt.s32.totalorder %s15, 1
      %s147 = scalar_select %p146, %s15, 1
      %s148 = smul.addr %s147, 3
      %s149 = smul.addr %s148, 4
      %s150 = scalar_lea.vmem %s0, %s149
      %p151 = pneg %p36
      %p152 = pneg %p33
      %p153 = pneg %p57
      %p154 = pneg %p54
      %p155 = pneg %p83
      %p156 = pneg %p80
      %p157 = scmp.lt.s32.totalorder %s15, 1
      %s158 = scalar_select %p157, %s15, 1
      %s159 = smul.addr %s158, 2
      %s160 = smul.addr %s159, 8
      %s161 = scalar_lea.vmem %s2, %s160
      %p162 = pneg %p109
      %p163 = pneg %p106
      %p164 = scmp.lt.s32.totalorder %s15, 1
      %s165 = scalar_select %p164, %s15, 1
      %s166 = smul.addr %s165, 2
      %s167 = scalar_lea.vmem %s3, %s166
      %p168 = scmp.lt.s32.totalorder %s15, 1
      %s169 = scalar_select %p168, %s15, 1
      %s170 = smul.addr %s169, 3
      %s171 = smul.addr %s170, 4
      %s172 = scalar_lea.vmem %s0, %s171
      %p173 = scmp.lt.s32.totalorder %s15, 1
      %s174 = scalar_select %p173, %s15, 1
      %s175 = smul.addr %s174, 2
      %s176 = smul.addr %s175, 8
      %s177 = scalar_lea.vmem %s2, %s176
      %p178 = scmp.lt.s32.totalorder %s15, 1
      %s179 = scalar_select %p178, %s15, 1
      %s180 = smul.addr %s179, 2
      %s181 = scalar_lea.vmem %s3, %s180
      %v183 = vld [vmem:[%s172] sm:$0xf]
      %v184 = vld [vmem:[%s172 + $0x4] sm:$0xf]
      %v185 = vld [vmem:[%s172 + $0x8] sm:$0x1]
      %v186 = vld [vmem:[%s1] sm:$0xf]
      %v187 = vld [vmem:[%s1 + $0x4] sm:$0xf]
      %v188 = vld [vmem:[%s1 + $0x8] sm:$0xf]
      %v189 = vld [vmem:[%s1 + $0xc] sm:$0xf]
      %v190 = vld [vmem:[%s1 + $0x10] sm:$0xf]
      %v191 = vld [vmem:[%s1 + $0x14] sm:$0xf]
      %v192 = vld [vmem:[%s1 + $0x18] sm:$0xf]
      %v193 = vld [vmem:[%s1 + $0x1c] sm:$0xf]
      %v194 = vld [vmem:[%s1 + $0x20] sm:$0xf]
      %v195 = vld [vmem:[%s1 + $0x24] sm:$0xf]
      %v196 = vld [vmem:[%s1 + $0x28] sm:$0xf]
      %v197 = vld [vmem:[%s1 + $0x2c] sm:$0xf]
      %v198 = vld [vmem:[%s1 + $0x30] sm:$0xf]
      %v199 = vld [vmem:[%s1 + $0x34] sm:$0xf]
      %v200 = vld [vmem:[%s1 + $0x38] sm:$0xf]
      %v201 = vld [vmem:[%s1 + $0x3c] sm:$0xf]
      %s202 = scalar_lea.vmem %s1, 64
      %v203 = vld [vmem:[%s202] sm:$0xf]
      %v204 = vld [vmem:[%s202 + $0x4] sm:$0xf]
      %v205 = vld [vmem:[%s202 + $0x8] sm:$0xf]
      %v206 = vld [vmem:[%s202 + $0xc] sm:$0xf]
      %v207 = vld [vmem:[%s202 + $0x10] sm:$0xf]
      %v208 = vld [vmem:[%s202 + $0x14] sm:$0xf]
      %v209 = vld [vmem:[%s202 + $0x18] sm:$0xf]
      %v210 = vld [vmem:[%s202 + $0x1c] sm:$0xf]
      %v211 = vld [vmem:[%s202 + $0x20] sm:$0xf]
      %v212 = vld [vmem:[%s202 + $0x24] sm:$0xf]
      %v213 = vld [vmem:[%s202 + $0x28] sm:$0xf]
      %v214 = vld [vmem:[%s202 + $0x2c] sm:$0xf]
      %v215 = vld [vmem:[%s202 + $0x30] sm:$0xf]
      %v216 = vld [vmem:[%s202 + $0x34] sm:$0xf]
      %v217 = vld [vmem:[%s202 + $0x38] sm:$0xf]
      %v218 = vld [vmem:[%s202 + $0x3c] sm:$0xf]
      %v222 = vunpack.c.l.b16 %v183
      %v223 = vunpack.c.l.b16 %v184
      %v224 = vunpack.c.l.b16 %v185
      %v225 = vpack.c.b16 %v223, %v222
      %v226 = vpack.c.b16 %v224, %v224
      %vm227 = vsmask.f32 7424
      %v229 = vshrl.u32 %v225, 16
      %v231 = vshll.u32 %v225, 16
      %v233 = vrot.slane %v231, 1
      %v234 = vor.u32 %v229, %v233
      %v236 = vshll.u32 %v226, 16
      %v238 = vrot.slane %v236, 1
      %v239 = vsel %vm227, %v234, %v238
      %v257 = vunpack.c.l.b16 %v203
      %v258 = vunpack.c.l.b16 %v204
      %v259 = vunpack.c.l.b16 %v205
      %v260 = vunpack.c.l.b16 %v206
      %v261 = vunpack.c.l.b16 %v207
      %v262 = vunpack.c.l.b16 %v208
      %v263 = vunpack.c.l.b16 %v209
      %v264 = vunpack.c.l.b16 %v210
      %v265 = vunpack.c.l.b16 %v211
      %v266 = vunpack.c.l.b16 %v212
      %v267 = vunpack.c.l.b16 %v213
      %v268 = vunpack.c.l.b16 %v214
      %v269 = vunpack.c.l.b16 %v215
      %v270 = vunpack.c.l.b16 %v216
      %v271 = vunpack.c.l.b16 %v217
      %v272 = vunpack.c.l.b16 %v218
      %v273 = vpack.c.b16 %v258, %v257
      %v274 = vpack.c.b16 %v260, %v259
      %v275 = vpack.c.b16 %v262, %v261
      %v276 = vpack.c.b16 %v264, %v263
      %v277 = vpack.c.b16 %v266, %v265
      %v278 = vpack.c.b16 %v268, %v267
      %v279 = vpack.c.b16 %v270, %v269
      %v280 = vpack.c.b16 %v272, %v271
      %289 = vmatprep.subr.bf16.mxu0 0
      %290 = vmatpush1.bf16.msra.mxu0 %v280
      %291 = vmatprep.subr.bf16.mxu0 0
      %292 = vmatpush1.bf16.msra.mxu0 %v279
      %293 = vmatprep.subr.bf16.mxu0 0
      %294 = vmatpush1.bf16.msra.mxu0 %v278
      %295 = vmatprep.subr.bf16.mxu0 0
      %296 = vmatpush1.bf16.msra.mxu0 %v277
      %297 = vmatprep.subr.bf16.mxu0 0
      %298 = vmatpush1.bf16.msra.mxu0 %v276
      %299 = vmatprep.subr.bf16.mxu0 0
      %300 = vmatpush1.bf16.msra.mxu0 %v275
      %301 = vmatprep.subr.bf16.mxu0 0
      %302 = vmatpush1.bf16.msra.mxu0 %v274
      %303 = vmatprep.subr.bf16.mxu0 0
      %304 = vmatpush1.bf16.msra.mxu0 %v273
      %305 = vmatprep.subr.bf16.mxu0 0
      %306 = vmatpush2.bf16.msra.mxu0 0
      %307 = vmatprep.subr.bf16.mxu0 0
      %308 = vmatpush2.bf16.msra.mxu0 0
      %309 = vmatprep.subr.bf16.mxu0 0
      %310 = vmatpush2.bf16.msra.mxu0 0
      %311 = vmatprep.subr.bf16.mxu0 0
      %312 = vmatpush2.bf16.msra.mxu0 0
      %313 = vmatprep.subr.bf16.mxu0 0
      %314 = vmatpush2.bf16.msra.mxu0 0
      %315 = vmatprep.subr.bf16.mxu0 0
      %316 = vmatpush2.bf16.msra.mxu0 0
      %317 = vmatprep.subr.bf16.mxu0 0
      %318 = vmatpush2.bf16.msra.mxu0 0
      %319 = vmatprep.subr.bf16.mxu0 0
      %320 = vmatpush2.bf16.msra.mxu0 0
      %321 = vmatprep.mubr.bf16.mxu0 0
      %322 = vmatmul.mubr.bf16.gmra.mxu0 %v239
      %v323 = vpop.f32.mrf.mxu0
      %v324 = vadd.f32 0.0, %v323
      %v325 = vpop.f32.mrf.mxu0
      %v326 = vpop.f32.mrf.mxu0
      %v327 = vadd.f32 0.0, %v326
      %v328 = vpop.f32.mrf.mxu0
      %329 = vdwg.mxu0
      %v347 = vunpack.c.l.b16 %v186
      %v348 = vunpack.c.l.b16 %v187
      %v349 = vunpack.c.l.b16 %v188
      %v350 = vunpack.c.l.b16 %v189
      %v351 = vunpack.c.l.b16 %v190
      %v352 = vunpack.c.l.b16 %v191
      %v353 = vunpack.c.l.b16 %v192
      %v354 = vunpack.c.l.b16 %v193
      %v355 = vunpack.c.l.b16 %v194
      %v356 = vunpack.c.l.b16 %v195
      %v357 = vunpack.c.l.b16 %v196
      %v358 = vunpack.c.l.b16 %v197
      %v359 = vunpack.c.l.b16 %v198
      %v360 = vunpack.c.l.b16 %v199
      %v361 = vunpack.c.l.b16 %v200
      %v362 = vunpack.c.l.b16 %v201
      %v363 = vpack.c.b16 %v348, %v347
      %v364 = vpack.c.b16 %v350, %v349
      %v365 = vpack.c.b16 %v352, %v351
      %v366 = vpack.c.b16 %v354, %v353
      %v367 = vpack.c.b16 %v356, %v355
      %v368 = vpack.c.b16 %v358, %v357
      %v369 = vpack.c.b16 %v360, %v359
      %v370 = vpack.c.b16 %v362, %v361
      %379 = vmatprep.subr.bf16.mxu0 0
      %380 = vmatpush1.bf16.msra.mxu0 %v370
      %381 = vmatprep.subr.bf16.mxu0 0
      %382 = vmatpush1.bf16.msra.mxu0 %v369
      %383 = vmatprep.subr.bf16.mxu0 0
      %384 = vmatpush1.bf16.msra.mxu0 %v368
      %385 = vmatprep.subr.bf16.mxu0 0
      %386 = vmatpush1.bf16.msra.mxu0 %v367
      %387 = vmatprep.subr.bf16.mxu0 0
      %388 = vmatpush1.bf16.msra.mxu0 %v366
      %389 = vmatprep.subr.bf16.mxu0 0
      %390 = vmatpush1.bf16.msra.mxu0 %v365
      %391 = vmatprep.subr.bf16.mxu0 0
      %392 = vmatpush1.bf16.msra.mxu0 %v364
      %393 = vmatprep.subr.bf16.mxu0 0
      %394 = vmatpush1.bf16.msra.mxu0 %v363
      %395 = vmatprep.subr.bf16.mxu0 0
      %396 = vmatpush2.bf16.msra.mxu0 0
      %397 = vmatprep.subr.bf16.mxu0 0
      %398 = vmatpush2.bf16.msra.mxu0 0
      %399 = vmatprep.subr.bf16.mxu0 0
      %400 = vmatpush2.bf16.msra.mxu0 0
      %401 = vmatprep.subr.bf16.mxu0 0
      %402 = vmatpush2.bf16.msra.mxu0 0
      %403 = vmatprep.subr.bf16.mxu0 0
      %404 = vmatpush2.bf16.msra.mxu0 0
      %405 = vmatprep.subr.bf16.mxu0 0
      %406 = vmatpush2.bf16.msra.mxu0 0
      %407 = vmatprep.subr.bf16.mxu0 0
      %408 = vmatpush2.bf16.msra.mxu0 0
      %409 = vmatprep.subr.bf16.mxu0 0
      %410 = vmatpush2.bf16.msra.mxu0 0
      %411 = vmatprep.mubr.bf16.mxu0 0
      %412 = vmatmul.mubr.bf16.gmra.mxu0 %v225
      %v413 = vpop.f32.mrf.mxu0
      %v414 = vadd.f32 %v324, %v413
      %v415 = vpop.f32.mrf.mxu0
      %v416 = vpop.f32.mrf.mxu0
      %v417 = vadd.f32 %v327, %v416
      %v418 = vpop.f32.mrf.mxu0
      %419 = vdwg.mxu0
      %s420 = scalar_lea.vmem %s1, 128
      %v421 = vld [vmem:[%s420] sm:$0xf]
      %v422 = vld [vmem:[%s420 + $0x4] sm:$0xf]
      %v423 = vld [vmem:[%s420 + $0x8] sm:$0xf]
      %v424 = vld [vmem:[%s420 + $0xc] sm:$0xf]
      %v425 = vld [vmem:[%s420 + $0x10] sm:$0xf]
      %v426 = vld [vmem:[%s420 + $0x14] sm:$0xf]
      %v427 = vld [vmem:[%s420 + $0x18] sm:$0xf]
      %v428 = vld [vmem:[%s420 + $0x1c] sm:$0xf]
      %v429 = vld [vmem:[%s420 + $0x20] sm:$0xf]
      %v430 = vld [vmem:[%s420 + $0x24] sm:$0xf]
      %v431 = vld [vmem:[%s420 + $0x28] sm:$0xf]
      %v432 = vld [vmem:[%s420 + $0x2c] sm:$0xf]
      %v433 = vld [vmem:[%s420 + $0x30] sm:$0xf]
      %v434 = vld [vmem:[%s420 + $0x34] sm:$0xf]
      %v435 = vld [vmem:[%s420 + $0x38] sm:$0xf]
      %v436 = vld [vmem:[%s420 + $0x3c] sm:$0xf]
      %vm437 = vcmask 1046528
      %v438 = vrot.slane %v225, 1
      %v439 = vrot.slane %v226, 1
      %v440 = vsel %vm437, %v438, %v439
      %v458 = vunpack.c.l.b16 %v421
      %v459 = vunpack.c.l.b16 %v422
      %v460 = vunpack.c.l.b16 %v423
      %v461 = vunpack.c.l.b16 %v424
      %v462 = vunpack.c.l.b16 %v425
      %v463 = vunpack.c.l.b16 %v426
      %v464 = vunpack.c.l.b16 %v427
      %v465 = vunpack.c.l.b16 %v428
      %v466 = vunpack.c.l.b16 %v429
      %v467 = vunpack.c.l.b16 %v430
      %v468 = vunpack.c.l.b16 %v431
      %v469 = vunpack.c.l.b16 %v432
      %v470 = vunpack.c.l.b16 %v433
      %v471 = vunpack.c.l.b16 %v434
      %v472 = vunpack.c.l.b16 %v435
      %v473 = vunpack.c.l.b16 %v436
      %v474 = vpack.c.b16 %v459, %v458
      %v475 = vpack.c.b16 %v461, %v460
      %v476 = vpack.c.b16 %v463, %v462
      %v477 = vpack.c.b16 %v465, %v464
      %v478 = vpack.c.b16 %v467, %v466
      %v479 = vpack.c.b16 %v469, %v468
      %v480 = vpack.c.b16 %v471, %v470
      %v481 = vpack.c.b16 %v473, %v472
      %490 = vmatprep.subr.bf16.mxu0 0
      %491 = vmatpush1.bf16.msra.mxu0 %v481
      %492 = vmatprep.subr.bf16.mxu0 0
      %493 = vmatpush1.bf16.msra.mxu0 %v480
      %494 = vmatprep.subr.bf16.mxu0 0
      %495 = vmatpush1.bf16.msra.mxu0 %v479
      %496 = vmatprep.subr.bf16.mxu0 0
      %497 = vmatpush1.bf16.msra.mxu0 %v478
      %498 = vmatprep.subr.bf16.mxu0 0
      %499 = vmatpush1.bf16.msra.mxu0 %v477
      %500 = vmatprep.subr.bf16.mxu0 0
      %501 = vmatpush1.bf16.msra.mxu0 %v476
      %502 = vmatprep.subr.bf16.mxu0 0
      %503 = vmatpush1.bf16.msra.mxu0 %v475
      %504 = vmatprep.subr.bf16.mxu0 0
      %505 = vmatpush1.bf16.msra.mxu0 %v474
      %506 = vmatprep.subr.bf16.mxu0 0
      %507 = vmatpush2.bf16.msra.mxu0 0
      %508 = vmatprep.subr.bf16.mxu0 0
      %509 = vmatpush2.bf16.msra.mxu0 0
      %510 = vmatprep.subr.bf16.mxu0 0
      %511 = vmatpush2.bf16.msra.mxu0 0
      %512 = vmatprep.subr.bf16.mxu0 0
      %513 = vmatpush2.bf16.msra.mxu0 0
      %514 = vmatprep.subr.bf16.mxu0 0
      %515 = vmatpush2.bf16.msra.mxu0 0
      %516 = vmatprep.subr.bf16.mxu0 0
      %517 = vmatpush2.bf16.msra.mxu0 0
      %518 = vmatprep.subr.bf16.mxu0 0
      %519 = vmatpush2.bf16.msra.mxu0 0
      %520 = vmatprep.subr.bf16.mxu0 0
      %521 = vmatpush2.bf16.msra.mxu0 0
      %522 = vmatprep.mubr.bf16.mxu0 0
      %523 = vmatmul.mubr.bf16.gmra.mxu0 %v440
      %v524 = vpop.f32.mrf.mxu0
      %v525 = vadd.f32 0.0, %v524
      %v526 = vpop.f32.mrf.mxu0
      %v527 = vpop.f32.mrf.mxu0
      %v528 = vadd.f32 0.0, %v527
      %v529 = vpop.f32.mrf.mxu0
      %530 = vdwg.mxu0
      %v531 = vadd.f32 %v414, %v525
      %v532 = vadd.f32 %v417, %v528
      %533 = vst [vmem:[%s177] sm:$0xff] %v531
      %534 = vst [vmem:[%s177 + $0x8] sm:$0xff] %v532
      %v535 = vadd.f32 %v531, %v532
      %v536 = vrot.slane %v535, 4
      %v537 = vadd.f32 %v535, %v536
      %v538 = vrot.slane %v537, 2
      %v539 = vadd.f32 %v537, %v538
      %v540 = vrot.slane %v539, 1
      %v541 = vadd.f32 %v539, %v540
      %542 = vst [vmem:[%s181] sm:$0x1] %v541
      %v543 = vmul.f32 %v531, %v531
      %v544 = vmul.f32 %v532, %v532
      %v545 = vadd.f32 %v543, %v544
      %v546 = vrot.slane %v545, 4
      %v547 = vadd.f32 %v545, %v546
      %v548 = vrot.slane %v547, 2
      %v549 = vadd.f32 %v547, %v548
      %v550 = vrot.slane %v549, 1
      %v551 = vadd.f32 %v549, %v550
      %552 = vst [vmem:[%s181 + $0x1] sm:$0x1] %v551
      %p553 = scmp.lt.s32.totalorder %s15, 1
      %s554 = scalar_select %p553, %s15, 1
      %s555 = smul.addr %s554, 2
      %s556 = smul.addr %s555, 8
      %s557 = scalar_lea.vmem %s2, %s556
      %p558 = scmp.lt.s32.totalorder %s15, 1
      %s559 = scalar_select %p558, %s15, 1
      %s560 = smul.addr %s559, 2
      %s561 = scalar_lea.vmem %s3, %s560
      // Predicated region
      $region29: #{block_forward.3} parent=27 // pred_check
        %p562 = pneg %p80
      $region30: #{block_forward.3} parent=27 // pred_check_branch
        %564 = sbr.rel (%p562) target = $region32
      $region31: #{block_forward.3} parent=27 // pred_region
        _
      $region32: #{block_forward.3} parent=27 // pred_fallthru
        _
      // Predicated region
      $region33: #{block_forward.3} parent=27 // pred_check
        %p565 = pneg %p106
      $region34: #{block_forward.3} parent=27 // pred_check_branch
        %567 = sbr.rel (%p565) target = $region36
      $region35: #{block_forward.3} parent=27 // pred_region
        _
      $region36: #{block_forward.3} parent=27 // pred_fallthru
        _
    $region28: #{block_forward.3} parent=5 // pred_fallthru
      _
    %p568 = scmp.le.s32.totalorder 2, %s10
    // Predicated region
    $region37: #{block_forward.3} parent=5 // pred_check
      %p569 = pneg %p568
    $region38: #{block_forward.3} parent=5 // pred_check_branch
      %571 = sbr.rel (%p569) target = $region40
    $region39: #{block_forward.3} parent=5 // pred_region
      %s572 = ssub.s32 %s10, 2
      // Predicated region
      $region41: #{block_forward.3} parent=39 // pred_check
        %p573 = pneg %p86
      $region42: #{block_forward.3} parent=39 // pred_check_branch
        %575 = sbr.rel (%p573) target = $region44
      $region43: #{block_forward.3} parent=39 // pred_region
        %p576 = scmp.lt.s32.totalorder %s16, 1
        %s577 = scalar_select %p576, %s16, 1
        %s578 = smul.addr %s577, 2
        %s579 = smul.addr %s578, 8
        %s580 = scalar_lea.vmem %s2, %s579
      $region44: #{block_forward.3} parent=39 // pred_fallthru
        _
      // Predicated region
      $region45: #{block_forward.3} parent=39 // pred_check
        %p581 = pneg %p112
      $region46: #{block_forward.3} parent=39 // pred_check_branch
        %583 = sbr.rel (%p581) target = $region48
      $region47: #{block_forward.3} parent=39 // pred_region
        %p584 = scmp.lt.s32.totalorder %s16, 1
        %s585 = scalar_select %p584, %s16, 1
        %s586 = smul.addr %s585, 2
        %s587 = scalar_lea.vmem %s3, %s586
      $region48: #{block_forward.3} parent=39 // pred_fallthru
        _
    $region40: #{block_forward.3} parent=5 // pred_fallthru
      _
  $region6: #{block_forward.3} parent=0 // loop_footer
    %s14 = sadd.s32 1, %s10
  $region7: #{block_forward.3} parent=0 // loop_footer_branch
    %9 = sbr.rel target = $region3
  $region8: #{block_forward.3} parent=0 // loop_exit
    _

// kernel: block_forward.5
$region0: #{block_forward.5}
  #allocation0 [shape = 'u32[]', space=smem, size = 0x4, offset = 0x4, fixed_abs, tag = 'smem constant byte address 0x4 - core index']
  #allocation1 [shape = 'u32[144,128]{1,0:T(1,128)}', space=vmem, size = 0x12000, scoped, tag = 'internal scratch']
  %s0 = inlined_call_operand.vmem [shape: f32[2,16,128], index: 0, kind: input, shape index: {}]
  %s1 = inlined_call_operand.vmem [shape: f32[1,128], index: 1, kind: input, shape index: {}]
  %s2 = inlined_call_operand.vmem [shape: f32[1,128], index: 2, kind: input, shape index: {}]
  %s3 = inlined_call_operand.vmem [shape: f32[2,16,128], index: 3, kind: input, shape index: {}]
  %s4 = inlined_call_operand.vmem [shape: f32[2,16,128], index: 4, kind: output, shape index: {}]
  %s5 = sld [smem:[#allocation0]]
  $region49: #{block_forward.5} parent=0
    _
  %s7 = ssub.s32 1, %s5
  %s8 = scalar_select 0, %s7, %s5
  loop: start=0, step=1, limit=4
  $region2: #{block_forward.5} parent=0 // loop_pre_header
    _
  $region3: #{block_forward.5} parent=0 // loop_header
    %s10 = sphi 0, %s14
    %p11 = scmp.ge.s32.totalorder %s10, 4
    %s20 = sphi 0, %s22
    %s23 = sphi 0, %s20
    %s24 = sphi 0, %s23
    %s40 = sphi 0, %s24
    %s44 = sphi 0, %s44
    %s46 = sphi 0, %s44
    %s47 = sphi 0, %s46
    %s61 = sphi 0, %s47
    %s65 = sphi 0, %s65
    %s67 = sphi 0, %s65
    %s68 = sphi 0, %s67
    %s82 = sphi 0, %s68
    %s88 = sphi 0, %s90
    %s91 = sphi 0, %s88
    %s92 = sphi 0, %s91
    %s108 = sphi 0, %s92
    %s114 = sphi 0, %s116
    %s117 = sphi 0, %s114
    %s118 = sphi 0, %s117
    %s134 = sphi 0, %s118
  $region4: #{block_forward.5} parent=0 // loop_header_branch
    %13 = sbr.rel (%p11) target = $region8
  $region5: #{block_forward.5} parent=0 // loop_body
    %s15 = ssub.s32 %s10, 1
    %s16 = ssub.s32 %s10, 2
    %s17 = sadd.s32 %s10, 1
    %s18 = ssub.s32 %s10, %s17
    %p19 = scmp.eq.s32.totalorder %s18, 0
    %s21 = sadd.s32 %s20, 1
    %s22 = scalar_select %p19, %s20, %s21
    %p25 = pneg %p19
    %p26 = scmp.eq.s32.totalorder %s10, 1
    %p27 = por %p25, %p26
    %p28 = scmp.ne.s32.totalorder %s20, %s23
    %p29 = scmp.eq.s32.totalorder %s10, 0
    %p30 = por %p28, %p29
    %p31 = scmp.ne.s32.totalorder %s20, %s23
    %p32 = scmp.eq.s32.totalorder %s15, 1
    %p33 = por %p31, %p32
    %p34 = scmp.ne.s32.totalorder %s23, %s24
    %p35 = scmp.eq.s32.totalorder %s15, 0
    %p36 = por %p34, %p35
    %p37 = scmp.ne.s32.totalorder %s23, %s24
    %p38 = scmp.eq.s32.totalorder %s16, 1
    %p39 = por %p37, %p38
    %p41 = scmp.ne.s32.totalorder %s24, %s40
    %p42 = scmp.eq.s32.totalorder %s16, 0
    %p43 = por %p41, %p42
    %s45 = sadd.s32 %s44, 1
    %p48 = scmp.eq.s32.totalorder %s10, 1
    %p49 = scmp.ne.s32.totalorder %s44, %s46
    %p50 = scmp.eq.s32.totalorder %s10, 0
    %p51 = por %p49, %p50
    %p52 = scmp.ne.s32.totalorder %s44, %s46
    %p53 = scmp.eq.s32.totalorder %s15, 1
    %p54 = por %p52, %p53
    %p55 = scmp.ne.s32.totalorder %s46, %s47
    %p56 = scmp.eq.s32.totalorder %s15, 0
    %p57 = por %p55, %p56
    %p58 = scmp.ne.s32.totalorder %s46, %s47
    %p59 = scmp.eq.s32.totalorder %s16, 1
    %p60 = por %p58, %p59
    %p62 = scmp.ne.s32.totalorder %s47, %s61
    %p63 = scmp.eq.s32.totalorder %s16, 0
    %p64 = por %p62, %p63
    %s66 = sadd.s32 %s65, 1
    %p69 = scmp.eq.s32.totalorder %s10, 1
    %p70 = scmp.ne.s32.totalorder %s65, %s67
    %p71 = scmp.eq.s32.totalorder %s10, 0
    %p72 = por %p70, %p71
    %p73 = scmp.ne.s32.totalorder %s65, %s67
    %p74 = scmp.eq.s32.totalorder %s15, 1
    %p75 = por %p73, %p74
    %p76 = scmp.ne.s32.totalorder %s67, %s68
    %p77 = scmp.eq.s32.totalorder %s15, 0
    %p78 = por %p76, %p77
    %p79 = scmp.ne.s32.totalorder %s67, %s68
    %p80 = scmp.eq.s32.totalorder %s16, 1
    %p81 = por %p79, %p80
    %p83 = scmp.ne.s32.totalorder %s68, %s82
    %p84 = scmp.eq.s32.totalorder %s16, 0
    %p85 = por %p83, %p84
    %s86 = ssub.s32 %s10, %s17
    %p87 = scmp.eq.s32.totalorder %s86, 0
    %s89 = sadd.s32 %s88, 1
    %s90 = scalar_select %p87, %s88, %s89
    %p93 = pneg %p87
    %p94 = scmp.eq.s32.totalorder %s10, 1
    %p95 = por %p93, %p94
    %p96 = scmp.ne.s32.totalorder %s88, %s91
    %p97 = scmp.eq.s32.totalorder %s10, 0
    %p98 = por %p96, %p97
    %p99 = scmp.ne.s32.totalorder %s88, %s91
    %p100 = scmp.eq.s32.totalorder %s15, 1
    %p101 = por %p99, %p100
    %p102 = scmp.ne.s32.totalorder %s91, %s92
    %p103 = scmp.eq.s32.totalorder %s15, 0
    %p104 = por %p102, %p103
    %p105 = scmp.ne.s32.totalorder %s91, %s92
    %p106 = scmp.eq.s32.totalorder %s16, 1
    %p107 = por %p105, %p106
    %p109 = scmp.ne.s32.totalorder %s92, %s108
    %p110 = scmp.eq.s32.totalorder %s16, 0
    %p111 = por %p109, %p110
    %s112 = ssub.s32 %s10, %s17
    %p113 = scmp.eq.s32.totalorder %s112, 0
    %s115 = sadd.s32 %s114, 1
    %s116 = scalar_select %p113, %s114, %s115
    %p119 = pneg %p113
    %p120 = scmp.eq.s32.totalorder %s10, 1
    %p121 = por %p119, %p120
    %p122 = scmp.ne.s32.totalorder %s114, %s117
    %p123 = scmp.eq.s32.totalorder %s10, 0
    %p124 = por %p122, %p123
    %p125 = scmp.ne.s32.totalorder %s114, %s117
    %p126 = scmp.eq.s32.totalorder %s15, 1
    %p127 = por %p125, %p126
    %p128 = scmp.ne.s32.totalorder %s117, %s118
    %p129 = scmp.eq.s32.totalorder %s15, 0
    %p130 = por %p128, %p129
    %p131 = scmp.ne.s32.totalorder %s117, %s118
    %p132 = scmp.eq.s32.totalorder %s16, 1
    %p133 = por %p131, %p132
    %p135 = scmp.ne.s32.totalorder %s118, %s134
    %p136 = scmp.eq.s32.totalorder %s16, 0
    %p137 = por %p135, %p136
    %p138 = scmp.le.s32.totalorder 1, %s10
    %p139 = scmp.lt.s32.totalorder %s10, 3
    %p140 = pnand %p138, %p139
    %p141 = pneg %p140
    // Predicated region
    $region9: #{block_forward.5} parent=5 // pred_check
      _
    $region10: #{block_forward.5} parent=5 // pred_check_branch
      %143 = sbr.rel (%p140) target = $region12
    $region11: #{block_forward.5} parent=5 // pred_region
      %s144 = ssub.s32 %s10, 1
      // Predicated region
      $region13: #{block_forward.5} parent=11 // pred_check
        %p145 = pneg %p57
      $region14: #{block_forward.5} parent=11 // pred_check_branch
        %147 = sbr.rel (%p145) target = $region16
      $region15: #{block_forward.5} parent=11 // pred_region
        _
      $region16: #{block_forward.5} parent=11 // pred_fallthru
        _
      // Predicated region
      $region17: #{block_forward.5} parent=11 // pred_check
        %p148 = pneg %p78
      $region18: #{block_forward.5} parent=11 // pred_check_branch
        %150 = sbr.rel (%p148) target = $region20
      $region19: #{block_forward.5} parent=11 // pred_region
        _
      $region20: #{block_forward.5} parent=11 // pred_fallthru
        _
    $region12: #{block_forward.5} parent=5 // pred_fallthru
      _
    %p151 = scmp.lt.s32.totalorder %s10, 2
    // Predicated region
    $region21: #{block_forward.5} parent=5 // pred_check
      %p152 = pneg %p151
    $region22: #{block_forward.5} parent=5 // pred_check_branch
      %154 = sbr.rel (%p152) target = $region24
    $region23: #{block_forward.5} parent=5 // pred_region
      // Predicated region
      $region25: #{block_forward.5} parent=23 // pred_check
        %p155 = pneg %p30
      $region26: #{block_forward.5} parent=23 // pred_check_branch
        %157 = sbr.rel (%p155) target = $region28
      $region27: #{block_forward.5} parent=23 // pred_region
        %p158 = scmp.lt.s32.totalorder %s10, 1
        %s159 = scalar_select %p158, %s10, 1
        %s160 = smul.addr %s159, 2
        %s161 = smul.addr %s160, 8
        %s162 = scalar_lea.vmem %s0, %s161
      $region28: #{block_forward.5} parent=23 // pred_fallthru
        _
      // Predicated region
      $region29: #{block_forward.5} parent=23 // pred_check
        %p163 = pneg %p98
      $region30: #{block_forward.5} parent=23 // pred_check_branch
        %165 = sbr.rel (%p163) target = $region32
      $region31: #{block_forward.5} parent=23 // pred_region
        %p166 = scmp.lt.s32.totalorder %s10, 1
        %s167 = scalar_select %p166, %s10, 1
        %s168 = smul.addr %s167, 2
        %s169 = smul.addr %s168, 8
        %s170 = scalar_lea.vmem %s3, %s169
      $region32: #{block_forward.5} parent=23 // pred_fallthru
        _
    $region24: #{block_forward.5} parent=5 // pred_fallthru
      _
    %p171 = scmp.le.s32.totalorder 1, %s10
    %p172 = scmp.lt.s32.totalorder %s10, 3
    %p173 = pnand %p171, %p172
    %p174 = pneg %p173
    // Predicated region
    $region33: #{block_forward.5} parent=5 // pred_check
      _
    $region34: #{block_forward.5} parent=5 // pred_check_branch
      %176 = sbr.rel (%p173) target = $region36
    $region35: #{block_forward.5} parent=5 // pred_region
      %s177 = ssub.s32 %s10, 1
      %p178 = scmp.lt.s32.totalorder %s15, 1
      %s179 = scalar_select %p178, %s15, 1
      %s180 = smul.addr %s179, 2
      %s181 = smul.addr %s180, 8
      %s182 = scalar_lea.vmem %s0, %s181
      %p183 = pneg %p36
      %p184 = pneg %p33
      %p185 = pneg %p57
      %p186 = pneg %p54
      %p187 = pneg %p78
      %p188 = pneg %p75
      %p189 = scmp.lt.s32.totalorder %s15, 1
      %s190 = scalar_select %p189, %s15, 1
      %s191 = smul.addr %s190, 2
      %s192 = smul.addr %s191, 8
      %s193 = scalar_lea.vmem %s3, %s192
      %p194 = pneg %p104
      %p195 = pneg %p101
      %p196 = pneg %p130
      %p197 = pneg %p127
      %p198 = scmp.lt.s32.totalorder %s15, 1
      %s199 = scalar_select %p198, %s15, 1
      %s200 = smul.addr %s199, 2
      %s201 = smul.addr %s200, 8
      %s202 = scalar_lea.vmem %s4, %s201
      %p203 = scmp.lt.s32.totalorder %s15, 1
      %s204 = scalar_select %p203, %s15, 1
      %s205 = smul.addr %s204, 2
      %s206 = smul.addr %s205, 8
      %s207 = scalar_lea.vmem %s0, %s206
      %p208 = scmp.lt.s32.totalorder %s15, 1
      %s209 = scalar_select %p208, %s15, 1
      %s210 = smul.addr %s209, 2
      %s211 = smul.addr %s210, 8
      %s212 = scalar_lea.vmem %s3, %s211
      %p213 = scmp.lt.s32.totalorder %s15, 1
      %s214 = scalar_select %p213, %s15, 1
      %s215 = smul.addr %s214, 2
      %s216 = smul.addr %s215, 8
      %s217 = scalar_lea.vmem %s4, %s216
      %v218 = vld [vmem:[%s207] sm:$0xff]
      %v219 = vld [vmem:[%s207 + $0x8] sm:$0xff]
      %v220 = vld [vmem:[%s1] sm:$0x1]
      %v222 = vlaneseq
      %v223 = vshrl.u32 %v222, 7
      %v224 = vsub.s32 0, %v223
      %v225 = vrot.slane %v220, %v224
      %v227 = vmul.f32 %v218, %v225
      %v228 = vmul.f32 %v219, %v225
      %v229 = vld [vmem:[%s2] sm:$0x1]
      %v231 = vlaneseq
      %v232 = vshrl.u32 %v231, 7
      %v233 = vsub.s32 0, %v232
      %v234 = vrot.slane %v229, %v233
      %v236 = vadd.f32 %v227, %v234
      %v237 = vadd.f32 %v228, %v234
      %v238 = vld [vmem:[%s212] sm:$0xff]
      %v239 = vld [vmem:[%s212 + $0x8] sm:$0xff]
      %v240 = vadd.f32 %v236, %v238
      %v241 = vadd.f32 %v237, %v239
      %v242 = vmax.f32 %v240, 0.0
      %v243 = vmax.f32 %v241, 0.0
      %244 = vst [vmem:[%s217] sm:$0xff] %v242
      %245 = vst [vmem:[%s217 + $0x8] sm:$0xff] %v243
      %p246 = scmp.lt.s32.totalorder %s15, 1
      %s247 = scalar_select %p246, %s15, 1
      %s248 = smul.addr %s247, 2
      %s249 = smul.addr %s248, 8
      %s250 = scalar_lea.vmem %s4, %s249
      // Predicated region
      $region37: #{block_forward.5} parent=35 // pred_check
        %p251 = pneg %p127
      $region38: #{block_forward.5} parent=35 // pred_check_branch
        %253 = sbr.rel (%p251) target = $region40
      $region39: #{block_forward.5} parent=35 // pred_region
        _
      $region40: #{block_forward.5} parent=35 // pred_fallthru
        _
    $region36: #{block_forward.5} parent=5 // pred_fallthru
      _
    %p254 = scmp.le.s32.totalorder 2, %s10
    // Predicated region
    $region41: #{block_forward.5} parent=5 // pred_check
      %p255 = pneg %p254
    $region42: #{block_forward.5} parent=5 // pred_check_branch
      %257 = sbr.rel (%p255) target = $region44
    $region43: #{block_forward.5} parent=5 // pred_region
      %s258 = ssub.s32 %s10, 2
      // Predicated region
      $region45: #{block_forward.5} parent=43 // pred_check
        %p259 = pneg %p133
      $region46: #{block_forward.5} parent=43 // pred_check_branch
        %261 = sbr.rel (%p259) target = $region48
      $region47: #{block_forward.5} parent=43 // pred_region
        %p262 = scmp.lt.s32.totalorder %s16, 1
        %s263 = scalar_select %p262, %s16, 1
        %s264 = smul.addr %s263, 2
        %s265 = smul.addr %s264, 8
        %s266 = scalar_lea.vmem %s4, %s265
      $region48: #{block_forward.5} parent=43 // pred_fallthru
        _
    $region44: #{block_forward.5} parent=5 // pred_fallthru
      _
  $region6: #{block_forward.5} parent=0 // loop_footer
    %s14 = sadd.s32 1, %s10
  $region7: #{block_forward.5} parent=0 // loop_footer_branch
    %9 = sbr.rel target = $region3
  $region8: #{block_forward.5} parent=0 // loop_exit
    _

// kernel: block_forward.4
$region0: #{block_forward.4}
  #allocation0 [shape = 'u32[]', space=smem, size = 0x4, offset = 0x4, fixed_abs, tag = 'smem constant byte address 0x4 - core index']
  #allocation1 [shape = 'u32[144,128]{1,0:T(1,128)}', space=vmem, size = 0x12000, scoped, tag = 'internal scratch']
  #allocation2 [shape = 'bf16[18,128]{1,0:T(8,128)(2,1)}', space=vmem, size = 0x1800, scoped, tag = 'scratch operand']
  %s0 = inlined_call_operand.vmem [shape: f32[2,16,128], index: 0, kind: input, shape index: {}]
  %s1 = inlined_call_operand.vmem [shape: f32[1,128], index: 1, kind: input, shape index: {}]
  %s2 = inlined_call_operand.vmem [shape: f32[1,128], index: 2, kind: input, shape index: {}]
  %s3 = inlined_call_operand.vmem [shape: bf16[3,128,128], index: 3, kind: input, shape index: {}]
  %s4 = inlined_call_operand.vmem [shape: f32[2,16,128], index: 4, kind: output, shape index: {0}]
  %s5 = inlined_call_operand.vmem [shape: f32[2,2,128], index: 5, kind: output, shape index: {1}]
  %6 = xla_tuple %s4, %s5
  %s7 = sld [smem:[#allocation0]]
  $region57: #{block_forward.4} parent=0
    _
  %s9 = ssub.s32 1, %s7
  %s10 = scalar_select 0, %s9, %s7
  loop: start=0, step=1, limit=4
  $region2: #{block_forward.4} parent=0 // loop_pre_header
    _
  $region3: #{block_forward.4} parent=0 // loop_header
    %s12 = sphi 0, %s16
    %p13 = scmp.ge.s32.totalorder %s12, 4
    %s22 = sphi 0, %s24
    %s25 = sphi 0, %s22
    %s26 = sphi 0, %s25
    %s42 = sphi 0, %s26
    %s46 = sphi 0, %s46
    %s48 = sphi 0, %s46
    %s49 = sphi 0, %s48
    %s63 = sphi 0, %s49
    %s67 = sphi 0, %s67
    %s69 = sphi 0, %s67
    %s70 = sphi 0, %s69
    %s84 = sphi 0, %s70
    %s88 = sphi 0, %s88
    %s90 = sphi 0, %s88
    %s91 = sphi 0, %s90
    %s105 = sphi 0, %s91
    %s111 = sphi 0, %s113
    %s114 = sphi 0, %s111
    %s115 = sphi 0, %s114
    %s131 = sphi 0, %s115
    %s137 = sphi 0, %s139
    %s140 = sphi 0, %s137
    %s141 = sphi 0, %s140
    %s157 = sphi 0, %s141
  $region4: #{block_forward.4} parent=0 // loop_header_branch
    %15 = sbr.rel (%p13) target = $region8
  $region5: #{block_forward.4} parent=0 // loop_body
    %s17 = ssub.s32 %s12, 1
    %s18 = ssub.s32 %s12, 2
    %s19 = sadd.s32 %s12, 1
    %s20 = ssub.s32 %s12, %s19
    %p21 = scmp.eq.s32.totalorder %s20, 0
    %s23 = sadd.s32 %s22, 1
    %s24 = scalar_select %p21, %s22, %s23
    %p27 = pneg %p21
    %p28 = scmp.eq.s32.totalorder %s12, 1
    %p29 = por %p27, %p28
    %p30 = scmp.ne.s32.totalorder %s22, %s25
    %p31 = scmp.eq.s32.totalorder %s12, 0
    %p32 = por %p30, %p31
    %p33 = scmp.ne.s32.totalorder %s22, %s25
    %p34 = scmp.eq.s32.totalorder %s17, 1
    %p35 = por %p33, %p34
    %p36 = scmp.ne.s32.totalorder %s25, %s26
    %p37 = scmp.eq.s32.totalorder %s17, 0
    %p38 = por %p36, %p37
    %p39 = scmp.ne.s32.totalorder %s25, %s26
    %p40 = scmp.eq.s32.totalorder %s18, 1
    %p41 = por %p39, %p40
    %p43 = scmp.ne.s32.totalorder %s26, %s42
    %p44 = scmp.eq.s32.totalorder %s18, 0
    %p45 = por %p43, %p44
    %s47 = sadd.s32 %s46, 1
    %p50 = scmp.eq.s32.totalorder %s12, 1
    %p51 = scmp.ne.s32.totalorder %s46, %s48
    %p52 = scmp.eq.s32.totalorder %s12, 0
    %p53 = por %p51, %p52
    %p54 = scmp.ne.s32.totalorder %s46, %s48
    %p55 = scmp.eq.s32.totalorder %s17, 1
    %p56 = por %p54, %p55
    %p57 = scmp.ne.s32.totalorder %s48, %s49
    %p58 = scmp.eq.s32.totalorder %s17, 0
    %p59 = por %p57, %p58
    %p60 = scmp.ne.s32.totalorder %s48, %s49
    %p61 = scmp.eq.s32.totalorder %s18, 1
    %p62 = por %p60, %p61
    %p64 = scmp.ne.s32.totalorder %s49, %s63
    %p65 = scmp.eq.s32.totalorder %s18, 0
    %p66 = por %p64, %p65
    %s68 = sadd.s32 %s67, 1
    %p71 = scmp.eq.s32.totalorder %s12, 1
    %p72 = scmp.ne.s32.totalorder %s67, %s69
    %p73 = scmp.eq.s32.totalorder %s12, 0
    %p74 = por %p72, %p73
    %p75 = scmp.ne.s32.totalorder %s67, %s69
    %p76 = scmp.eq.s32.totalorder %s17, 1
    %p77 = por %p75, %p76
    %p78 = scmp.ne.s32.totalorder %s69, %s70
    %p79 = scmp.eq.s32.totalorder %s17, 0
    %p80 = por %p78, %p79
    %p81 = scmp.ne.s32.totalorder %s69, %s70
    %p82 = scmp.eq.s32.totalorder %s18, 1
    %p83 = por %p81, %p82
    %p85 = scmp.ne.s32.totalorder %s70, %s84
    %p86 = scmp.eq.s32.totalorder %s18, 0
    %p87 = por %p85, %p86
    %s89 = sadd.s32 %s88, 1
    %p92 = scmp.eq.s32.totalorder %s12, 1
    %p93 = scmp.ne.s32.totalorder %s88, %s90
    %p94 = scmp.eq.s32.totalorder %s12, 0
    %p95 = por %p93, %p94
    %p96 = scmp.ne.s32.totalorder %s88, %s90
    %p97 = scmp.eq.s32.totalorder %s17, 1
    %p98 = por %p96, %p97
    %p99 = scmp.ne.s32.totalorder %s90, %s91
    %p100 = scmp.eq.s32.totalorder %s17, 0
    %p101 = por %p99, %p100
    %p102 = scmp.ne.s32.totalorder %s90, %s91
    %p103 = scmp.eq.s32.totalorder %s18, 1
    %p104 = por %p102, %p103
    %p106 = scmp.ne.s32.totalorder %s91, %s105
    %p107 = scmp.eq.s32.totalorder %s18, 0
    %p108 = por %p106, %p107
    %s109 = ssub.s32 %s12, %s19
    %p110 = scmp.eq.s32.totalorder %s109, 0
    %s112 = sadd.s32 %s111, 1
    %s113 = scalar_select %p110, %s111, %s112
    %p116 = pneg %p110
    %p117 = scmp.eq.s32.totalorder %s12, 1
    %p118 = por %p116, %p117
    %p119 = scmp.ne.s32.totalorder %s111, %s114
    %p120 = scmp.eq.s32.totalorder %s12, 0
    %p121 = por %p119, %p120
    %p122 = scmp.ne.s32.totalorder %s111, %s114
    %p123 = scmp.eq.s32.totalorder %s17, 1
    %p124 = por %p122, %p123
    %p125 = scmp.ne.s32.totalorder %s114, %s115
    %p126 = scmp.eq.s32.totalorder %s17, 0
    %p127 = por %p125, %p126
    %p128 = scmp.ne.s32.totalorder %s114, %s115
    %p129 = scmp.eq.s32.totalorder %s18, 1
    %p130 = por %p128, %p129
    %p132 = scmp.ne.s32.totalorder %s115, %s131
    %p133 = scmp.eq.s32.totalorder %s18, 0
    %p134 = por %p132, %p133
    %s135 = ssub.s32 %s12, %s19
    %p136 = scmp.eq.s32.totalorder %s135, 0
    %s138 = sadd.s32 %s137, 1
    %s139 = scalar_select %p136, %s137, %s138
    %p142 = pneg %p136
    %p143 = scmp.eq.s32.totalorder %s12, 1
    %p144 = por %p142, %p143
    %p145 = scmp.ne.s32.totalorder %s137, %s140
    %p146 = scmp.eq.s32.totalorder %s12, 0
    %p147 = por %p145, %p146
    %p148 = scmp.ne.s32.totalorder %s137, %s140
    %p149 = scmp.eq.s32.totalorder %s17, 1
    %p150 = por %p148, %p149
    %p151 = scmp.ne.s32.totalorder %s140, %s141
    %p152 = scmp.eq.s32.totalorder %s17, 0
    %p153 = por %p151, %p152
    %p154 = scmp.ne.s32.totalorder %s140, %s141
    %p155 = scmp.eq.s32.totalorder %s18, 1
    %p156 = por %p154, %p155
    %p158 = scmp.ne.s32.totalorder %s141, %s157
    %p159 = scmp.eq.s32.totalorder %s18, 0
    %p160 = por %p158, %p159
    %p161 = scmp.le.s32.totalorder 1, %s12
    %p162 = scmp.lt.s32.totalorder %s12, 3
    %p163 = pnand %p161, %p162
    %p164 = pneg %p163
    // Predicated region
    $region9: #{block_forward.4} parent=5 // pred_check
      _
    $region10: #{block_forward.4} parent=5 // pred_check_branch
      %166 = sbr.rel (%p163) target = $region12
    $region11: #{block_forward.4} parent=5 // pred_region
      %s167 = ssub.s32 %s12, 1
      // Predicated region
      $region13: #{block_forward.4} parent=11 // pred_check
        %p168 = pneg %p59
      $region14: #{block_forward.4} parent=11 // pred_check_branch
        %170 = sbr.rel (%p168) target = $region16
      $region15: #{block_forward.4} parent=11 // pred_region
        _
      $region16: #{block_forward.4} parent=11 // pred_fallthru
        _
      // Predicated region
      $region17: #{block_forward.4} parent=11 // pred_check
        %p171 = pneg %p80
      $region18: #{block_forward.4} parent=11 // pred_check_branch
        %173 = sbr.rel (%p171) target = $region20
      $region19: #{block_forward.4} parent=11 // pred_region
        _
      $region20: #{block_forward.4} parent=11 // pred_fallthru
        _
      // Predicated region
      $region21: #{block_forward.4} parent=11 // pred_check
        %p174 = pneg %p101
      $region22: #{block_forward.4} parent=11 // pred_check_branch
        %176 = sbr.rel (%p174) target = $region24
      $region23: #{block_forward.4} parent=11 // pred_region
        _
      $region24: #{block_forward.4} parent=11 // pred_fallthru
        _
    $region12: #{block_forward.4} parent=5 // pred_fallthru
      _
    %p177 = scmp.lt.s32.totalorder %s12, 2
    // Predicated region
    $region25: #{block_forward.4} parent=5 // pred_check
      %p178 = pneg %p177
    $region26: #{block_forward.4} parent=5 // pred_check_branch
      %180 = sbr.rel (%p178) target = $region28
    $region27: #{block_forward.4} parent=5 // pred_region
      // Predicated region
      $region29: #{block_forward.4} parent=27 // pred_check
        %p181 = pneg %p32
      $region30: #{block_forward.4} parent=27 // pred_check_branch
        %183 = sbr.rel (%p181) target = $region32
      $region31: #{block_forward.4} parent=27 // pred_region
        %p184 = scmp.lt.s32.totalorder %s12, 1
        %s185 = scalar_select %p184, %s12, 1
        %s186 = smul.addr %s185, 2
        %s187 = smul.addr %s186, 8
        %s188 = scalar_lea.vmem %s0, %s187
      $region32: #{block_forward.4} parent=27 // pred_fallthru
        _
    $region28: #{block_forward.4} parent=5 // pred_fallthru
      _
    %p189 = scmp.le.s32.totalorder 1, %s12
    %p190 = scmp.lt.s32.totalorder %s12, 3
    %p191 = pnand %p189, %p190
    %p192 = pneg %p191
    // Predicated region
    $region33: #{block_forward.4} parent=5 // pred_check
      _
    $region34: #{block_forward.4} parent=5 // pred_check_branch
      %194 = sbr.rel (%p191) target = $region36
    $region35: #{block_forward.4} parent=5 // pred_region
      %s195 = ssub.s32 %s12, 1
      %p196 = scmp.lt.s32.totalorder %s17, 1
      %s197 = scalar_select %p196, %s17, 1
      %s198 = smul.addr %s197, 2
      %s199 = smul.addr %s198, 8
      %s200 = scalar_lea.vmem %s0, %s199
      %p201 = pneg %p38
      %p202 = pneg %p35
      %p203 = pneg %p59
      %p204 = pneg %p56
      %p205 = pneg %p80
      %p206 = pneg %p77
      %p207 = pneg %p101
      %p208 = pneg %p98
      %p209 = pneg %p127
      %p210 = pneg %p124
      %p211 = scmp.lt.s32.totalorder %s17, 1
      %s212 = scalar_select %p211, %s17, 1
      %s213 = smul.addr %s212, 2
      %s214 = smul.addr %s213, 8
      %s215 = scalar_lea.vmem %s4, %s214
      %p216 = pneg %p153
      %p217 = pneg %p150
      %p218 = scmp.lt.s32.totalorder %s17, 1
      %s219 = scalar_select %p218, %s17, 1
      %s220 = smul.addr %s219, 2
      %s221 = scalar_lea.vmem %s5, %s220
      %p222 = scmp.lt.s32.totalorder %s17, 1
      %s223 = scalar_select %p222, %s17, 1
      %s224 = smul.addr %s223, 2
      %s225 = smul.addr %s224, 8
      %s226 = scalar_lea.vmem %s0, %s225
      %p227 = scmp.lt.s32.totalorder %s17, 1
      %s228 = scalar_select %p227, %s17, 1
      %s229 = smul.addr %s228, 2
      %s230 = smul.addr %s229, 8
      %s231 = scalar_lea.vmem %s4, %s230
      %p232 = scmp.lt.s32.totalorder %s17, 1
      %s233 = scalar_select %p232, %s17, 1
      %s234 = smul.addr %s233, 2
      %s235 = scalar_lea.vmem %s5, %s234
      %v237 = vld [vmem:[%s226] sm:$0xff]
      %v238 = vld [vmem:[%s226 + $0x8] sm:$0xff]
      %v239 = vld [vmem:[%s1] sm:$0x1]
      %v241 = vlaneseq
      %v242 = vshrl.u32 %v241, 7
      %v243 = vsub.s32 0, %v242
      %v244 = vrot.slane %v239, %v243
      %v246 = vmul.f32 %v237, %v244
      %v247 = vmul.f32 %v238, %v244
      %v248 = vld [vmem:[%s2] sm:$0x1]
      %v250 = vlaneseq
      %v251 = vshrl.u32 %v250, 7
      %v252 = vsub.s32 0, %v251
      %v253 = vrot.slane %v248, %v252
      %v255 = vadd.f32 %v246, %v253
      %v256 = vadd.f32 %v247, %v253
      %v257 = vmax.f32 %v255, 0.0
      %v258 = vmax.f32 %v256, 0.0
      %259 = vst [vmem:[#allocation2] sm:$0xf] 0
      %260 = vst [vmem:[#allocation2 + $0x4] sm:$0xf] 0
      %261 = vst [vmem:[#allocation2 + $0x8] sm:$0x1] 0
      %v262 = vpack.c.bf16 %v258, %v257
      %v264 = vunpack.c.l.b16 %v262
      %v265 = vunpack.c.h.b16 %v262
      %v266 = vpack.c.b16 %v264, %v264
      %v267 = vpack.c.b16 %v265, %v265
      %vm268 = vsmask.f32 256
      %vm269 = vsmask.f32 4368
      %vm270 = vmor %vm268, %vm269
      %v272 = vshrl.u32 %v266, 16
      %v274 = vrot.slane %v272, 7
      %v275 = vshll.u32 %v266, 16
      %v277 = vor.u32 %v274, %v275
      %v278 = vrot.slane %v274, 4
      %v280 = vshrl.u32 %v267, 16
      %v282 = vrot.slane %v280, 7
      %v283 = vshll.u32 %v267, 16
      %v285 = vor.u32 %v282, %v283
      %v286 = vsel %vm270, %v278, %v285
      %v287 = vrot.slane %v282, 4
      %vm291 = vcmask 1043456
      %vm292 = vsmask.f32 7938
      %vm293 = vmand %vm291, %vm292
      %v294 = vld [vmem:[#allocation2] sm:$0xf]
      %v295 = vsel %vm293, %v277, %v294
      %296 = vst [vmem:[#allocation2] sm:$0xf] %v295
      %297 = vst [vmem:[#allocation2 + $0x4] sm:$0xf] %v286
      %vm298 = vcmask 1040384
      %vm299 = vmand %vm298, %vm268
      %v300 = vld [vmem:[#allocation2 + $0x8] sm:$0x1]
      %v301 = vsel %vm299, %v287, %v300
      %302 = vst [vmem:[#allocation2 + $0x8] sm:$0x1] %v301
      %v303 = vld [vmem:[#allocation2] sm:$0xf]
      %v304 = vld [vmem:[#allocation2 + $0x4] sm:$0xf]
      %v305 = vld [vmem:[%s3] sm:$0xf]
      %v306 = vld [vmem:[%s3 + $0x4] sm:$0xf]
      %v307 = vld [vmem:[%s3 + $0x8] sm:$0xf]
      %v308 = vld [vmem:[%s3 + $0xc] sm:$0xf]
      %v309 = vld [vmem:[%s3 + $0x10] sm:$0xf]
      %v310 = vld [vmem:[%s3 + $0x14] sm:$0xf]
      %v311 = vld [vmem:[%s3 + $0x18] sm:$0xf]
      %v312 = vld [vmem:[%s3 + $0x1c] sm:$0xf]
      %v313 = vld [vmem:[%s3 + $0x20] sm:$0xf]
      %v314 = vld [vmem:[%s3 + $0x24] sm:$0xf]
      %v315 = vld [vmem:[%s3 + $0x28] sm:$0xf]
      %v316 = vld [vmem:[%s3 + $0x2c] sm:$0xf]
      %v317 = vld [vmem:[%s3 + $0x30] sm:$0xf]
      %v318 = vld [vmem:[%s3 + $0x34] sm:$0xf]
      %v319 = vld [vmem:[%s3 + $0x38] sm:$0xf]
      %v320 = vld [vmem:[%s3 + $0x3c] sm:$0xf]
      %v321 = vld [vmem:[#allocation2 + $0x8] sm:$0x1]
      %s322 = scalar_lea.vmem %s3, 64
      %v323 = vld [vmem:[%s322] sm:$0xf]
      %v324 = vld [vmem:[%s322 + $0x4] sm:$0xf]
      %v325 = vld [vmem:[%s322 + $0x8] sm:$0xf]
      %v326 = vld [vmem:[%s322 + $0xc] sm:$0xf]
      %v327 = vld [vmem:[%s322 + $0x10] sm:$0xf]
      %v328 = vld [vmem:[%s322 + $0x14] sm:$0xf]
      %v329 = vld [vmem:[%s322 + $0x18] sm:$0xf]
      %v330 = vld [vmem:[%s322 + $0x1c] sm:$0xf]
      %v331 = vld [vmem:[%s322 + $0x20] sm:$0xf]
      %v332 = vld [vmem:[%s322 + $0x24] sm:$0xf]
      %v333 = vld [vmem:[%s322 + $0x28] sm:$0xf]
      %v334 = vld [vmem:[%s322 + $0x2c] sm:$0xf]
      %v335 = vld [vmem:[%s322 + $0x30] sm:$0xf]
      %v336 = vld [vmem:[%s322 + $0x34] sm:$0xf]
      %v337 = vld [vmem:[%s322 + $0x38] sm:$0xf]
      %v338 = vld [vmem:[%s322 + $0x3c] sm:$0xf]
      %v342 = vunpack.c.l.b16 %v303
      %v343 = vunpack.c.l.b16 %v304
      %v344 = vunpack.c.l.b16 %v321
      %v345 = vpack.c.b16 %v343, %v342
      %v346 = vpack.c.b16 %v344, %v344
      %vm347 = vsmask.f32 7424
      %v349 = vshrl.u32 %v345, 16
      %v351 = vshll.u32 %v345, 16
      %v353 = vrot.slane %v351, 1
      %v354 = vor.u32 %v349, %v353
      %v356 = vshll.u32 %v346, 16
      %v358 = vrot.slane %v356, 1
      %v359 = vsel %vm347, %v354, %v358
      %v377 = vunpack.c.l.b16 %v323
      %v378 = vunpack.c.l.b16 %v324
      %v379 = vunpack.c.l.b16 %v325
      %v380 = vunpack.c.l.b16 %v326
      %v381 = vunpack.c.l.b16 %v327
      %v382 = vunpack.c.l.b16 %v328
      %v383 = vunpack.c.l.b16 %v329
      %v384 = vunpack.c.l.b16 %v330
      %v385 = vunpack.c.l.b16 %v331
      %v386 = vunpack.c.l.b16 %v332
      %v387 = vunpack.c.l.b16 %v333
      %v388 = vunpack.c.l.b16 %v334
      %v389 = vunpack.c.l.b16 %v335
      %v390 = vunpack.c.l.b16 %v336
      %v391 = vunpack.c.l.b16 %v337
      %v392 = vunpack.c.l.b16 %v338
      %v393 = vpack.c.b16 %v378, %v377
      %v394 = vpack.c.b16 %v380, %v379
      %v395 = vpack.c.b16 %v382, %v381
      %v396 = vpack.c.b16 %v384, %v383
      %v397 = vpack.c.b16 %v386, %v385
      %v398 = vpack.c.b16 %v388, %v387
      %v399 = vpack.c.b16 %v390, %v389
      %v400 = vpack.c.b16 %v392, %v391
      %409 = vmatprep.subr.bf16.mxu0 0
      %410 = vmatpush1.bf16.msra.mxu0 %v400
      %411 = vmatprep.subr.bf16.mxu0 0
      %412 = vmatpush1.bf16.msra.mxu0 %v399
      %413 = vmatprep.subr.bf16.mxu0 0
      %414 = vmatpush1.bf16.msra.mxu0 %v398
      %415 = vmatprep.subr.bf16.mxu0 0
      %416 = vmatpush1.bf16.msra.mxu0 %v397
      %417 = vmatprep.subr.bf16.mxu0 0
      %418 = vmatpush1.bf16.msra.mxu0 %v396
      %419 = vmatprep.subr.bf16.mxu0 0
      %420 = vmatpush1.bf16.msra.mxu0 %v395
      %421 = vmatprep.subr.bf16.mxu0 0
      %422 = vmatpush1.bf16.msra.mxu0 %v394
      %423 = vmatprep.subr.bf16.mxu0 0
      %424 = vmatpush1.bf16.msra.mxu0 %v393
      %425 = vmatprep.subr.bf16.mxu0 0
      %426 = vmatpush2.bf16.msra.mxu0 0
      %427 = vmatprep.subr.bf16.mxu0 0
      %428 = vmatpush2.bf16.msra.mxu0 0
      %429 = vmatprep.subr.bf16.mxu0 0
      %430 = vmatpush2.bf16.msra.mxu0 0
      %431 = vmatprep.subr.bf16.mxu0 0
      %432 = vmatpush2.bf16.msra.mxu0 0
      %433 = vmatprep.subr.bf16.mxu0 0
      %434 = vmatpush2.bf16.msra.mxu0 0
      %435 = vmatprep.subr.bf16.mxu0 0
      %436 = vmatpush2.bf16.msra.mxu0 0
      %437 = vmatprep.subr.bf16.mxu0 0
      %438 = vmatpush2.bf16.msra.mxu0 0
      %439 = vmatprep.subr.bf16.mxu0 0
      %440 = vmatpush2.bf16.msra.mxu0 0
      %441 = vmatprep.mubr.bf16.mxu0 0
      %442 = vmatmul.mubr.bf16.gmra.mxu0 %v359
      %v443 = vpop.f32.mrf.mxu0
      %v444 = vadd.f32 0.0, %v443
      %v445 = vpop.f32.mrf.mxu0
      %v446 = vpop.f32.mrf.mxu0
      %v447 = vadd.f32 0.0, %v446
      %v448 = vpop.f32.mrf.mxu0
      %449 = vdwg.mxu0
      %v467 = vunpack.c.l.b16 %v305
      %v468 = vunpack.c.l.b16 %v306
      %v469 = vunpack.c.l.b16 %v307
      %v470 = vunpack.c.l.b16 %v308
      %v471 = vunpack.c.l.b16 %v309
      %v472 = vunpack.c.l.b16 %v310
      %v473 = vunpack.c.l.b16 %v311
      %v474 = vunpack.c.l.b16 %v312
      %v475 = vunpack.c.l.b16 %v313
      %v476 = vunpack.c.l.b16 %v314
      %v477 = vunpack.c.l.b16 %v315
      %v478 = vunpack.c.l.b16 %v316
      %v479 = vunpack.c.l.b16 %v317
      %v480 = vunpack.c.l.b16 %v318
      %v481 = vunpack.c.l.b16 %v319
      %v482 = vunpack.c.l.b16 %v320
      %v483 = vpack.c.b16 %v468, %v467
      %v484 = vpack.c.b16 %v470, %v469
      %v485 = vpack.c.b16 %v472, %v471
      %v486 = vpack.c.b16 %v474, %v473
      %v487 = vpack.c.b16 %v476, %v475
      %v488 = vpack.c.b16 %v478, %v477
      %v489 = vpack.c.b16 %v480, %v479
      %v490 = vpack.c.b16 %v482, %v481
      %499 = vmatprep.subr.bf16.mxu0 0
      %500 = vmatpush1.bf16.msra.mxu0 %v490
      %501 = vmatprep.subr.bf16.mxu0 0
      %502 = vmatpush1.bf16.msra.mxu0 %v489
      %503 = vmatprep.subr.bf16.mxu0 0
      %504 = vmatpush1.bf16.msra.mxu0 %v488
      %505 = vmatprep.subr.bf16.mxu0 0
      %506 = vmatpush1.bf16.msra.mxu0 %v487
      %507 = vmatprep.subr.bf16.mxu0 0
      %508 = vmatpush1.bf16.msra.mxu0 %v486
      %509 = vmatprep.subr.bf16.mxu0 0
      %510 = vmatpush1.bf16.msra.mxu0 %v485
      %511 = vmatprep.subr.bf16.mxu0 0
      %512 = vmatpush1.bf16.msra.mxu0 %v484
      %513 = vmatprep.subr.bf16.mxu0 0
      %514 = vmatpush1.bf16.msra.mxu0 %v483
      %515 = vmatprep.subr.bf16.mxu0 0
      %516 = vmatpush2.bf16.msra.mxu0 0
      %517 = vmatprep.subr.bf16.mxu0 0
      %518 = vmatpush2.bf16.msra.mxu0 0
      %519 = vmatprep.subr.bf16.mxu0 0
      %520 = vmatpush2.bf16.msra.mxu0 0
      %521 = vmatprep.subr.bf16.mxu0 0
      %522 = vmatpush2.bf16.msra.mxu0 0
      %523 = vmatprep.subr.bf16.mxu0 0
      %524 = vmatpush2.bf16.msra.mxu0 0
      %525 = vmatprep.subr.bf16.mxu0 0
      %526 = vmatpush2.bf16.msra.mxu0 0
      %527 = vmatprep.subr.bf16.mxu0 0
      %528 = vmatpush2.bf16.msra.mxu0 0
      %529 = vmatprep.subr.bf16.mxu0 0
      %530 = vmatpush2.bf16.msra.mxu0 0
      %531 = vmatprep.mubr.bf16.mxu0 0
      %532 = vmatmul.mubr.bf16.gmra.mxu0 %v345
      %v533 = vpop.f32.mrf.mxu0
      %v534 = vadd.f32 %v444, %v533
      %v535 = vpop.f32.mrf.mxu0
      %v536 = vpop.f32.mrf.mxu0
      %v537 = vadd.f32 %v447, %v536
      %v538 = vpop.f32.mrf.mxu0
      %539 = vdwg.mxu0
      %v540 = vld [vmem:[#allocation2] sm:$0xe]
      %s541 = scalar_lea.vmem %s3, 128
      %v542 = vld [vmem:[%s541] sm:$0xf]
      %v543 = vld [vmem:[%s541 + $0x4] sm:$0xf]
      %v544 = vld [vmem:[%s541 + $0x8] sm:$0xf]
      %v545 = vld [vmem:[%s541 + $0xc] sm:$0xf]
      %v546 = vld [vmem:[%s541 + $0x10] sm:$0xf]
      %v547 = vld [vmem:[%s541 + $0x14] sm:$0xf]
      %v548 = vld [vmem:[%s541 + $0x18] sm:$0xf]
      %v549 = vld [vmem:[%s541 + $0x1c] sm:$0xf]
      %v550 = vld [vmem:[%s541 + $0x20] sm:$0xf]
      %v551 = vld [vmem:[%s541 + $0x24] sm:$0xf]
      %v552 = vld [vmem:[%s541 + $0x28] sm:$0xf]
      %v553 = vld [vmem:[%s541 + $0x2c] sm:$0xf]
      %v554 = vld [vmem:[%s541 + $0x30] sm:$0xf]
      %v555 = vld [vmem:[%s541 + $0x34] sm:$0xf]
      %v556 = vld [vmem:[%s541 + $0x38] sm:$0xf]
      %v557 = vld [vmem:[%s541 + $0x3c] sm:$0xf]
      %v559 = vunpack.c.l.b16 %v540
      %v560 = vpack.c.b16 %v343, %v559
      %vm561 = vcmask 1046528
      %v562 = vrot.slane %v560, 1
      %v563 = vrot.slane %v346, 1
      %v564 = vsel %vm561, %v562, %v563
      %v582 = vunpack.c.l.b16 %v542
      %v583 = vunpack.c.l.b16 %v543
      %v584 = vunpack.c.l.b16 %v544
      %v585 = vunpack.c.l.b16 %v545
      %v586 = vunpack.c.l.b16 %v546
      %v587 = vunpack.c.l.b16 %v547
      %v588 = vunpack.c.l.b16 %v548
      %v589 = vunpack.c.l.b16 %v549
      %v590 = vunpack.c.l.b16 %v550
      %v591 = vunpack.c.l.b16 %v551
      %v592 = vunpack.c.l.b16 %v552
      %v593 = vunpack.c.l.b16 %v553
      %v594 = vunpack.c.l.b16 %v554
      %v595 = vunpack.c.l.b16 %v555
      %v596 = vunpack.c.l.b16 %v556
      %v597 = vunpack.c.l.b16 %v557
      %v598 = vpack.c.b16 %v583, %v582
      %v599 = vpack.c.b16 %v585, %v584
      %v600 = vpack.c.b16 %v587, %v586
      %v601 = vpack.c.b16 %v589, %v588
      %v602 = vpack.c.b16 %v591, %v590
      %v603 = vpack.c.b16 %v593, %v592
      %v604 = vpack.c.b16 %v595, %v594
      %v605 = vpack.c.b16 %v597, %v596
      %614 = vmatprep.subr.bf16.mxu0 0
      %615 = vmatpush1.bf16.msra.mxu0 %v605
      %616 = vmatprep.subr.bf16.mxu0 0
      %617 = vmatpush1.bf16.msra.mxu0 %v604
      %618 = vmatprep.subr.bf16.mxu0 0
      %619 = vmatpush1.bf16.msra.mxu0 %v603
      %620 = vmatprep.subr.bf16.mxu0 0
      %621 = vmatpush1.bf16.msra.mxu0 %v602
      %622 = vmatprep.subr.bf16.mxu0 0
      %623 = vmatpush1.bf16.msra.mxu0 %v601
      %624 = vmatprep.subr.bf16.mxu0 0
      %625 = vmatpush1.bf16.msra.mxu0 %v600
      %626 = vmatprep.subr.bf16.mxu0 0
      %627 = vmatpush1.bf16.msra.mxu0 %v599
      %628 = vmatprep.subr.bf16.mxu0 0
      %629 = vmatpush1.bf16.msra.mxu0 %v598
      %630 = vmatprep.subr.bf16.mxu0 0
      %631 = vmatpush2.bf16.msra.mxu0 0
      %632 = vmatprep.subr.bf16.mxu0 0
      %633 = vmatpush2.bf16.msra.mxu0 0
      %634 = vmatprep.subr.bf16.mxu0 0
      %635 = vmatpush2.bf16.msra.mxu0 0
      %636 = vmatprep.subr.bf16.mxu0 0
      %637 = vmatpush2.bf16.msra.mxu0 0
      %638 = vmatprep.subr.bf16.mxu0 0
      %639 = vmatpush2.bf16.msra.mxu0 0
      %640 = vmatprep.subr.bf16.mxu0 0
      %641 = vmatpush2.bf16.msra.mxu0 0
      %642 = vmatprep.subr.bf16.mxu0 0
      %643 = vmatpush2.bf16.msra.mxu0 0
      %644 = vmatprep.subr.bf16.mxu0 0
      %645 = vmatpush2.bf16.msra.mxu0 0
      %646 = vmatprep.mubr.bf16.mxu0 0
      %647 = vmatmul.mubr.bf16.gmra.mxu0 %v564
      %v648 = vpop.f32.mrf.mxu0
      %v649 = vadd.f32 0.0, %v648
      %v650 = vpop.f32.mrf.mxu0
      %v651 = vpop.f32.mrf.mxu0
      %v652 = vadd.f32 0.0, %v651
      %v653 = vpop.f32.mrf.mxu0
      %654 = vdwg.mxu0
      %v655 = vadd.f32 %v534, %v649
      %v656 = vadd.f32 %v537, %v652
      %657 = vst [vmem:[%s231] sm:$0xff] %v655
      %658 = vst [vmem:[%s231 + $0x8] sm:$0xff] %v656
      %v659 = vadd.f32 %v655, %v656
      %v660 = vrot.slane %v659, 4
      %v661 = vadd.f32 %v659, %v660
      %v662 = vrot.slane %v661, 2
      %v663 = vadd.f32 %v661, %v662
      %v664 = vrot.slane %v663, 1
      %v665 = vadd.f32 %v663, %v664
      %666 = vst [vmem:[%s235] sm:$0x1] %v665
      %v667 = vmul.f32 %v655, %v655
      %v668 = vmul.f32 %v656, %v656
      %v669 = vadd.f32 %v667, %v668
      %v670 = vrot.slane %v669, 4
      %v671 = vadd.f32 %v669, %v670
      %v672 = vrot.slane %v671, 2
      %v673 = vadd.f32 %v671, %v672
      %v674 = vrot.slane %v673, 1
      %v675 = vadd.f32 %v673, %v674
      %676 = vst [vmem:[%s235 + $0x1] sm:$0x1] %v675
      %p677 = scmp.lt.s32.totalorder %s17, 1
      %s678 = scalar_select %p677, %s17, 1
      %s679 = smul.addr %s678, 2
      %s680 = smul.addr %s679, 8
      %s681 = scalar_lea.vmem %s4, %s680
      %p682 = scmp.lt.s32.totalorder %s17, 1
      %s683 = scalar_select %p682, %s17, 1
      %s684 = smul.addr %s683, 2
      %s685 = scalar_lea.vmem %s5, %s684
      // Predicated region
      $region37: #{block_forward.4} parent=35 // pred_check
        %p686 = pneg %p124
      $region38: #{block_forward.4} parent=35 // pred_check_branch
        %688 = sbr.rel (%p686) target = $region40
      $region39: #{block_forward.4} parent=35 // pred_region
        _
      $region40: #{block_forward.4} parent=35 // pred_fallthru
        _
      // Predicated region
      $region41: #{block_forward.4} parent=35 // pred_check
        %p689 = pneg %p150
      $region42: #{block_forward.4} parent=35 // pred_check_branch
        %691 = sbr.rel (%p689) target = $region44
      $region43: #{block_forward.4} parent=35 // pred_region
        _
      $region44: #{block_forward.4} parent=35 // pred_fallthru
        _
    $region36: #{block_forward.4} parent=5 // pred_fallthru
      _
    %p692 = scmp.le.s32.totalorder 2, %s12
    // Predicated region
    $region45: #{block_forward.4} parent=5 // pred_check
      %p693 = pneg %p692
    $region46: #{block_forward.4} parent=5 // pred_check_branch
      %695 = sbr.rel (%p693) target = $region48
    $region47: #{block_forward.4} parent=5 // pred_region
      %s696 = ssub.s32 %s12, 2
      // Predicated region
      $region49: #{block_forward.4} parent=47 // pred_check
        %p697 = pneg %p130
      $region50: #{block_forward.4} parent=47 // pred_check_branch
        %699 = sbr.rel (%p697) target = $region52
      $region51: #{block_forward.4} parent=47 // pred_region
        %p700 = scmp.lt.s32.totalorder %s18, 1
        %s701 = scalar_select %p700, %s18, 1
        %s702 = smul.addr %s701, 2
        %s703 = smul.addr %s702, 8
        %s704 = scalar_lea.vmem %s4, %s703
      $region52: #{block_forward.4} parent=47 // pred_fallthru
        _
      // Predicated region
      $region53: #{block_forward.4} parent=47 // pred_check
        %p705 = pneg %p156
      $region54: #{block_forward.4} parent=47 // pred_check_branch
        %707 = sbr.rel (%p705) target = $region56
      $region55: #{block_forward.4} parent=47 // pred_region
        %p708 = scmp.lt.s32.totalorder %s18, 1
        %s709 = scalar_select %p708, %s18, 1
        %s710 = smul.addr %s709, 2
        %s711 = scalar_lea.vmem %s5, %s710
      $region56: #{block_forward.4} parent=47 // pred_fallthru
        _
    $region48: #{block_forward.4} parent=5 // pred_fallthru
      _
  $region6: #{block_forward.4} parent=0 // loop_footer
    %s16 = sadd.s32 1, %s12
  $region7: #{block_forward.4} parent=0 // loop_footer_branch
    %11 = sbr.rel target = $region3
  $region8: #{block_forward.4} parent=0 // loop_exit
    _

</llo_original>
